<compile_context>
chip_gen: v5e
topology: v5e:2x2
jax: 0.10.0
libtpu: 0.0.40
codegen_flags: <defaults>
</compile_context>

<pallas_src>
import jax
import jax.numpy as jnp
from jax import lax
from jax.experimental import pallas as pl
from jax.experimental.pallas import tpu as pltpu


def _rnn_kernel(gi_ref, li_ref, wg_ref, wl_ref, bhn_ref,
                out_g_ref, out_l_ref, h_g, h_l, c_l):
    ts = gi_ref.shape[0]            # static time-tile size
    Bp, H = h_g.shape

    @pl.when(pl.program_id(0) == 0)
    def _():
        h_g[...] = jnp.zeros_like(h_g)
        h_l[...] = jnp.zeros_like(h_l)
        c_l[...] = jnp.zeros_like(c_l)

    # Grid-invariant, lane-packed recurrent weights; loaded once per grid step
    # and hoisted out of the time loop.
    w_ghh = wg_ref[...]                                   # (H, 3H)  r | z | n
    w_lhh = wl_ref[...]                                   # (H, 4H)  i | f | o | g
    b_hn = jnp.broadcast_to(bhn_ref[...], (Bp, H))        # hoisted broadcast

    # Recurrent state lives in vregs within the tile, VMEM scratch across tiles.
    hg = h_g[...]
    hl = h_l[...]
    cl = c_l[...]

    g_outs = []
    l_outs = []
    # Static unroll over the time tile (ts is small, live ranges stay bounded).
    for s in range(ts):
        gi = gi_ref[s]              # (Bp, 3H) GRU  input proj (+ folded biases)
        li = li_ref[s]              # (Bp, 4H) LSTM input proj (+ folded biases)

        # One fused recurrent matmul per RNN per timestep.
        gh = jnp.dot(hg, w_ghh, preferred_element_type=jnp.float32)   # (Bp, 3H)
        lh = jnp.dot(hl, w_lhh, preferred_element_type=jnp.float32)   # (Bp, 4H)

        # ---------------- GRU cell (PyTorch gate order r, z, n) -------------
        rz = jax.nn.sigmoid(gi[:, :2 * H] + gh[:, :2 * H])   # one sigmoid slab
        r = rz[:, :H]
        z = rz[:, H:]
        n = jnp.tanh(gi[:, 2 * H:] + r * (gh[:, 2 * H:] + b_hn))
        hg = (1.0 - z) * n + z * hg
        g_outs.append(hg)

        # ---------------- LSTM cell (packed gate order i, f, o, g) ----------
        ifo = jax.nn.sigmoid(li[:, :3 * H] + lh[:, :3 * H])  # one sigmoid slab
        i_g = ifo[:, :H]
        f_g = ifo[:, H:2 * H]
        o_g = ifo[:, 2 * H:]
        g_g = jnp.tanh(li[:, 3 * H:] + lh[:, 3 * H:])
        cl = f_g * cl + i_g * g_g
        hl = o_g * jnp.tanh(cl)
        l_outs.append(hl)

    h_g[...] = hg
    h_l[...] = hl
    c_l[...] = cl

    # Lane-dense stores: one (Bp, ts*H) slab per RNN per grid step instead of
    # ts masked (Bp, H) partial stores.
    out_g_ref[0] = jnp.concatenate(g_outs, axis=-1)
    out_l_ref[0] = jnp.concatenate(l_outs, axis=-1)


def temporal_lstm_gru_layer(features, params, *, time_tile=None):
    """features: (B, T, D_in) -> (gru_out, lstm_out), each (B, T, H)."""
    B, T, D = features.shape
    H = params["gru_w_hh"].shape[1]

    # Time tile: prefer the largest divisor of T in [8, 32] (no padding);
    # otherwise use min(T, 32) and pad T up to a multiple (fixes the old ts=1
    # fallback for prime / awkward T).
    if time_tile is None:
        ts = min(T, 32)
        for cand in range(min(T, 32), 7, -1):
            if T % cand == 0:
                ts = cand
                break
    else:
        ts = time_tile
    Tp = ((T + ts - 1) // ts) * ts
    Bp = ((B + 7) // 8) * 8          # pad batch to sublane granule
    ng = Tp // ts

    x = features.astype(jnp.float32)
    x_tm = jnp.transpose(x, (1, 0, 2))                       # (T, B, D)
    if Tp != T or Bp != B:
        x_tm = jnp.pad(x_tm, ((0, Tp - T), (0, Bp - B), (0, 0)))
    x_flat = x_tm.reshape(Tp * Bp, D)

    lstm_perm = jnp.array([0, 1, 3, 2])   # PyTorch (i,f,g,o) -> packed (i,f,o,g)

    # ---- hoisted input projections: one (Tp*Bp, D) @ (D, 7H) XLA matmul ----
    # GRU biases: fold b_ih (all gates) + b_hh for r, z; b_hn stays in-kernel.
    w_ih_l = params["lstm_w_ih"].reshape(4, H, D)[lstm_perm].reshape(4 * H, D)
    w_in = jnp.concatenate([params["gru_w_ih"], w_ih_l], axis=0).T       # (D, 7H)
    b_gru = params["gru_b_ih"] + jnp.concatenate(
        [params["gru_b_hh"][:2 * H], jnp.zeros((H,), jnp.float32)])
    b_lstm = (params["lstm_b_ih"] + params["lstm_b_hh"]
              ).reshape(4, H)[lstm_perm].reshape(4 * H)
    b_in = jnp.concatenate([b_gru, b_lstm])                              # (7H,)
    proj = x_flat @ w_in + b_in                                          # (Tp*Bp, 7H)

    gi = proj[:, :3 * H].reshape(Tp, Bp, 3 * H)    # lane-packed r | z | n
    li = proj[:, 3 * H:].reshape(Tp, Bp, 4 * H)    # lane-packed i | f | o | g

    # ---- lane-packed recurrent weights: one fused dot per RNN per step -----
    w_ghh = jnp.transpose(params["gru_w_hh"].reshape(3, H, H),
                          (2, 0, 1)).reshape(H, 3 * H)                   # (H, 3H)
    w_lhh = jnp.transpose(params["lstm_w_hh"].reshape(4, H, H)[lstm_perm],
                          (2, 0, 1)).reshape(H, 4 * H)                   # (H, 4H)
    b_hn = params["gru_b_hh"][2 * H:].reshape(1, H)

    # VMEM budget (double-buffered gi/li/outputs + weights + state scratch).
    itemsize = 4
    vmem_needed = (
        2 * ts * Bp * 7 * H * itemsize          # gi + li, double-buffered
        + 2 * 2 * Bp * ts * H * itemsize        # two outputs, double-buffered
        + 2 * (7 * H * H + H) * itemsize        # packed weights + b_hn
        + 3 * Bp * H * itemsize                 # state scratch
    )
    vmem_limit = int(min(max(2 * vmem_needed + (1 << 20), 16 << 20), 64 << 20))

    in_specs = [
        pl.BlockSpec((ts, Bp, 3 * H), lambda t: (t, 0, 0)),
        pl.BlockSpec((ts, Bp, 4 * H), lambda t: (t, 0, 0)),
        # Grid-invariant weights (constant index_map -> no re-DMA across steps).
        pl.BlockSpec((H, 3 * H), lambda t: (0, 0)),
        pl.BlockSpec((H, 4 * H), lambda t: (0, 0)),
        pl.BlockSpec((1, H), lambda t: (0, 0)),
    ]
    out_specs = [
        pl.BlockSpec((1, Bp, ts * H), lambda t: (t, 0, 0)),
        pl.BlockSpec((1, Bp, ts * H), lambda t: (t, 0, 0)),
    ]

    grid_spec = pltpu.PrefetchScalarGridSpec(
        num_scalar_prefetch=0,
        grid=(ng,),
        in_specs=in_specs,
        out_specs=out_specs,
        scratch_shapes=[pltpu.VMEM((Bp, H), jnp.float32),   # h_gru
                        pltpu.VMEM((Bp, H), jnp.float32),   # h_lstm
                        pltpu.VMEM((Bp, H), jnp.float32)],  # c_lstm
    )

    out_g, out_l = pl.pallas_call(
        _rnn_kernel,
        out_shape=(jax.ShapeDtypeStruct((ng, Bp, ts * H), jnp.float32),
                   jax.ShapeDtypeStruct((ng, Bp, ts * H), jnp.float32)),
        grid_spec=grid_spec,
        compiler_params=pltpu.CompilerParams(
            dimension_semantics=("arbitrary",),   # recurrence -> sequential
            vmem_limit_bytes=vmem_limit),
    )(gi, li, w_ghh, w_lhh, b_hn)

    def _unpack(o):
        o = o.reshape(ng, Bp, ts, H)
        o = jnp.transpose(o, (1, 0, 2, 3)).reshape(Bp, Tp, H)
        return o[:B, :T]

    return _unpack(out_g), _unpack(out_l)


# --------------------------- pure-JAX reference ------------------------------
def reference_forward(features, params):
    B, T, D = features.shape
    H = params["gru_w_hh"].shape[1]

    def gru_step(h, x):
        gi = x @ params["gru_w_ih"].T + params["gru_b_ih"]
        gh = h @ params["gru_w_hh"].T + params["gru_b_hh"]
        r = jax.nn.sigmoid(gi[:, :H] + gh[:, :H])
        z = jax.nn.sigmoid(gi[:, H:2 * H] + gh[:, H:2 * H])
        n = jnp.tanh(gi[:, 2 * H:] + r * gh[:, 2 * H:])
        h_new = (1.0 - z) * n + z * h
        return h_new, h_new

    def lstm_step(carry, x):
        h, c = carry
        g = (x @ params["lstm_w_ih"].T + params["lstm_b_ih"]
             + h @ params["lstm_w_hh"].T + params["lstm_b_hh"])
        i = jax.nn.sigmoid(g[:, :H])
        f = jax.nn.sigmoid(g[:, H:2 * H])
        gg = jnp.tanh(g[:, 2 * H:3 * H])
        o = jax.nn.sigmoid(g[:, 3 * H:])
        c_new = f * c + i * gg
        h_new = o * jnp.tanh(c_new)
        return (h_new, c_new), h_new

    x_tm = jnp.transpose(features, (1, 0, 2))
    h0 = jnp.zeros((B, H), jnp.float32)
    _, gru_seq = lax.scan(gru_step, h0, x_tm)
    _, lstm_seq = lax.scan(lstm_step, (h0, h0), x_tm)
    return (jnp.transpose(gru_seq, (1, 0, 2)),
            jnp.transpose(lstm_seq, (1, 0, 2)))


def init_params(key, rnn_input_dim, rnn_output_dim):
    """Deterministic init matching nn.GRU / nn.LSTM parameter shapes."""
    H, D = rnn_output_dim, rnn_input_dim
    scale = 1.0 / jnp.sqrt(H)
    ks = jax.random.split(key, 8)
    u = lambda k, shape: jax.random.uniform(k, shape, jnp.float32, -scale, scale)
    return {
        "gru_w_ih": u(ks[0], (3 * H, D)),
        "gru_w_hh": u(ks[1], (3 * H, H)),
        "gru_b_ih": u(ks[2], (3 * H,)),
        "gru_b_hh": u(ks[3], (3 * H,)),
        "lstm_w_ih": u(ks[4], (4 * H, D)),
        "lstm_w_hh": u(ks[5], (4 * H, H)),
        "lstm_b_ih": u(ks[6], (4 * H,)),
        "lstm_b_hh": u(ks[7], (4 * H,)),
    }


if __name__ == "__main__":
    B, T, D_IN, H = 2, 8, 16, 32
    key = jax.random.PRNGKey(0)
    k_x, k_p = jax.random.split(key)

    features = jax.random.normal(k_x, (B, T, D_IN), jnp.float32)
    params = init_params(k_p, D_IN, H)

    gru_out, lstm_out = temporal_lstm_gru_layer(features, params)
    jax.block_until_ready((gru_out, lstm_out))

    ref_gru, ref_lstm = reference_forward(features, params)
    assert gru_out.shape == (B, T, H) and lstm_out.shape == (B, T, H)
    assert jnp.allclose(gru_out, ref_gru, atol=1e-4, rtol=1e-4)
    assert jnp.allclose(lstm_out, ref_lstm, atol=1e-4, rtol=1e-4)

    print("KERNEL_OK")
</pallas_src>

<mosaic_0001>
module attributes {stable_mosaic.version = 11 : i64} {
  func.func @_rnn_kernel(%arg0: i32, %arg1: memref<8x8x96xf32, #tpu.memory_space<vmem>>, %arg2: memref<8x8x128xf32, #tpu.memory_space<vmem>>, %arg3: memref<32x96xf32, #tpu.memory_space<vmem>>, %arg4: memref<32x128xf32, #tpu.memory_space<vmem>>, %arg5: memref<1x32xf32, #tpu.memory_space<vmem>>, %arg6: memref<1x8x256xf32, #tpu.memory_space<vmem>>, %arg7: memref<1x8x256xf32, #tpu.memory_space<vmem>>, %arg8: memref<8x32xf32, #tpu.memory_space<vmem>>, %arg9: memref<8x32xf32, #tpu.memory_space<vmem>>, %arg10: memref<8x32xf32, #tpu.memory_space<vmem>>) attributes {dimension_semantics = [#tpu.dimension_semantics<arbitrary>], iteration_bounds = array<i64: 1>, scalar_prefetch = 0 : i64, scratch_operands = 3 : i64, tpu.core_type = #tpu.core_type<tc>, window_params = [{transform_indices = @transform_0, window_bounds = array<i64: 8, 8, 96>}, {transform_indices = @transform_1, window_bounds = array<i64: 8, 8, 128>}, {pipeline_mode = #tpu.pipeline_mode<synchronous>, transform_indices = @transform_2, window_bounds = array<i64: 32, 96>}, {pipeline_mode = #tpu.pipeline_mode<synchronous>, transform_indices = @transform_3, window_bounds = array<i64: 32, 128>}, {pipeline_mode = #tpu.pipeline_mode<synchronous>, transform_indices = @transform_4, window_bounds = array<i64: 1, 32>}, {transform_indices = @transform_5, window_bounds = array<i64: 1, 8, 256>}, {transform_indices = @transform_6, window_bounds = array<i64: 1, 8, 256>}]} {
    %c0_i32 = arith.constant 0 : i32
    %0 = arith.cmpi eq, %arg0, %c0_i32 : i32
    %1 = arith.extui %0 : i1 to i32
    %c0_i32_0 = arith.constant 0 : i32
    %2 = arith.cmpi ne, %1, %c0_i32_0 : i32
    scf.if %2 {
      %cst_104 = arith.constant 0.000000e+00 : f32
      %398 = vector.broadcast %cst_104 : f32 to vector<8x32xf32>
      %c0_105 = arith.constant 0 : index
      %c0_106 = arith.constant 0 : index
      %399 = vector.load %arg8[%c0_105, %c0_106] : memref<8x32xf32, #tpu.memory_space<vmem>>, vector<8x32xf32>
      tpu.vector_store %arg8[%c0_105, %c0_106], %398 {strides = array<i32>} : memref<8x32xf32, #tpu.memory_space<vmem>>, vector<8x32xf32>,
      %cst_107 = arith.constant 0.000000e+00 : f32
      %400 = vector.broadcast %cst_107 : f32 to vector<8x32xf32>
      %c0_108 = arith.constant 0 : index
      %c0_109 = arith.constant 0 : index
      %401 = vector.load %arg9[%c0_108, %c0_109] : memref<8x32xf32, #tpu.memory_space<vmem>>, vector<8x32xf32>
      tpu.vector_store %arg9[%c0_108, %c0_109], %400 {strides = array<i32>} : memref<8x32xf32, #tpu.memory_space<vmem>>, vector<8x32xf32>,
      %cst_110 = arith.constant 0.000000e+00 : f32
      %402 = vector.broadcast %cst_110 : f32 to vector<8x32xf32>
      %c0_111 = arith.constant 0 : index
      %c0_112 = arith.constant 0 : index
      %403 = vector.load %arg10[%c0_111, %c0_112] : memref<8x32xf32, #tpu.memory_space<vmem>>, vector<8x32xf32>
      tpu.vector_store %arg10[%c0_111, %c0_112], %402 {strides = array<i32>} : memref<8x32xf32, #tpu.memory_space<vmem>>, vector<8x32xf32>,
    } else {
    }
    %c0 = arith.constant 0 : index
    %c0_1 = arith.constant 0 : index
    %3 = vector.load %arg3[%c0, %c0_1] : memref<32x96xf32, #tpu.memory_space<vmem>>, vector<32x96xf32>
    %c0_2 = arith.constant 0 : index
    %c0_3 = arith.constant 0 : index
    %4 = vector.load %arg4[%c0_2, %c0_3] : memref<32x128xf32, #tpu.memory_space<vmem>>, vector<32x128xf32>
    %c0_4 = arith.constant 0 : index
    %c0_5 = arith.constant 0 : index
    %5 = vector.load %arg5[%c0_4, %c0_5] : memref<1x32xf32, #tpu.memory_space<vmem>>, vector<1x32xf32>
    %6 = vector.shape_cast %5 : vector<1x32xf32> to vector<1x32xf32>
    %7 = vector.broadcast %6 : vector<1x32xf32> to vector<8x32xf32>
    %c0_6 = arith.constant 0 : index
    %c0_7 = arith.constant 0 : index
    %8 = vector.load %arg8[%c0_6, %c0_7] : memref<8x32xf32, #tpu.memory_space<vmem>>, vector<8x32xf32>
    %c0_8 = arith.constant 0 : index
    %c0_9 = arith.constant 0 : index
    %9 = vector.load %arg9[%c0_8, %c0_9] : memref<8x32xf32, #tpu.memory_space<vmem>>, vector<8x32xf32>
    %c0_10 = arith.constant 0 : index
    %c0_11 = arith.constant 0 : index
    %10 = vector.load %arg10[%c0_10, %c0_11] : memref<8x32xf32, #tpu.memory_space<vmem>>, vector<8x32xf32>
    %c0_12 = arith.constant 0 : index
    %c0_13 = arith.constant 0 : index
    %c0_14 = arith.constant 0 : index
    %11 = vector.load %arg1[%c0_12, %c0_13, %c0_14] : memref<8x8x96xf32, #tpu.memory_space<vmem>>, vector<1x8x96xf32>
    %12 = vector.shape_cast %11 : vector<1x8x96xf32> to vector<8x96xf32>
    %c0_15 = arith.constant 0 : index
    %c0_16 = arith.constant 0 : index
    %c0_17 = arith.constant 0 : index
    %13 = vector.load %arg2[%c0_15, %c0_16, %c0_17] : memref<8x8x128xf32, #tpu.memory_space<vmem>>, vector<1x8x128xf32>
    %14 = vector.shape_cast %13 : vector<1x8x128xf32> to vector<8x128xf32>
    %cst = arith.constant dense<0.000000e+00> : vector<8x96xf32>
    %15 = tpu.matmul %8, %3, %cst {dimension_numbers = #tpu.dot_dimension_numbers<[1], [0], [0], [1], [0, 0, 1, 1], [], []>} : vector<8x32xf32>, vector<32x96xf32>, vector<8x96xf32> -> vector<8x96xf32>
    %cst_18 = arith.constant dense<0.000000e+00> : vector<8x128xf32>
    %16 = tpu.matmul %9, %4, %cst_18 {dimension_numbers = #tpu.dot_dimension_numbers<[1], [0], [0], [1], [0, 0, 1, 1], [], []>} : vector<8x32xf32>, vector<32x128xf32>, vector<8x128xf32> -> vector<8x128xf32>
    %17 = vector.extract_strided_slice %12 {offsets = [0, 0], sizes = [8, 64], strides = [1, 1]} : vector<8x96xf32> to vector<8x64xf32>
    %18 = vector.extract_strided_slice %15 {offsets = [0, 0], sizes = [8, 64], strides = [1, 1]} : vector<8x96xf32> to vector<8x64xf32>
    %19 = arith.addf %17, %18 : vector<8x64xf32>
    %20 = arith.negf %19 : vector<8x64xf32>
    %21 = math.exp %20 : vector<8x64xf32>
    %cst_19 = arith.constant 1.000000e+00 : f32
    %22 = vector.broadcast %cst_19 : f32 to vector<8x64xf32>
    %23 = arith.addf %22, %21 : vector<8x64xf32>
    %24 = arith.divf %22, %23 : vector<8x64xf32>
    %25 = vector.extract_strided_slice %24 {offsets = [0, 0], sizes = [8, 32], strides = [1, 1]} : vector<8x64xf32> to vector<8x32xf32>
    %26 = vector.extract_strided_slice %24 {offsets = [0, 32], sizes = [8, 32], strides = [1, 1]} : vector<8x64xf32> to vector<8x32xf32>
    %27 = vector.extract_strided_slice %12 {offsets = [0, 64], sizes = [8, 32], strides = [1, 1]} : vector<8x96xf32> to vector<8x32xf32>
    %28 = vector.extract_strided_slice %15 {offsets = [0, 64], sizes = [8, 32], strides = [1, 1]} : vector<8x96xf32> to vector<8x32xf32>
    %29 = arith.addf %28, %7 : vector<8x32xf32>
    %30 = arith.mulf %25, %29 : vector<8x32xf32>
    %31 = arith.addf %27, %30 : vector<8x32xf32>
    %32 = math.tanh %31 : vector<8x32xf32>
    %cst_20 = arith.constant 1.000000e+00 : f32
    %33 = vector.broadcast %cst_20 : f32 to vector<8x32xf32>
    %34 = arith.subf %33, %26 : vector<8x32xf32>
    %35 = arith.mulf %34, %32 : vector<8x32xf32>
    %36 = arith.mulf %26, %8 : vector<8x32xf32>
    %37 = arith.addf %35, %36 : vector<8x32xf32>
    %38 = vector.extract_strided_slice %14 {offsets = [0, 0], sizes = [8, 96], strides = [1, 1]} : vector<8x128xf32> to vector<8x96xf32>
    %39 = vector.extract_strided_slice %16 {offsets = [0, 0], sizes = [8, 96], strides = [1, 1]} : vector<8x128xf32> to vector<8x96xf32>
    %40 = arith.addf %38, %39 : vector<8x96xf32>
    %41 = arith.negf %40 : vector<8x96xf32>
    %42 = math.exp %41 : vector<8x96xf32>
    %cst_21 = arith.constant 1.000000e+00 : f32
    %43 = vector.broadcast %cst_21 : f32 to vector<8x96xf32>
    %44 = arith.addf %43, %42 : vector<8x96xf32>
    %45 = arith.divf %43, %44 : vector<8x96xf32>
    %46 = vector.extract_strided_slice %45 {offsets = [0, 0], sizes = [8, 32], strides = [1, 1]} : vector<8x96xf32> to vector<8x32xf32>
    %47 = vector.extract_strided_slice %45 {offsets = [0, 32], sizes = [8, 32], strides = [1, 1]} : vector<8x96xf32> to vector<8x32xf32>
    %48 = vector.extract_strided_slice %45 {offsets = [0, 64], sizes = [8, 32], strides = [1, 1]} : vector<8x96xf32> to vector<8x32xf32>
    %49 = vector.extract_strided_slice %14 {offsets = [0, 96], sizes = [8, 32], strides = [1, 1]} : vector<8x128xf32> to vector<8x32xf32>
    %50 = vector.extract_strided_slice %16 {offsets = [0, 96], sizes = [8, 32], strides = [1, 1]} : vector<8x128xf32> to vector<8x32xf32>
    %51 = arith.addf %49, %50 : vector<8x32xf32>
    %52 = math.tanh %51 : vector<8x32xf32>
    %53 = arith.mulf %47, %10 : vector<8x32xf32>
    %54 = arith.mulf %46, %52 : vector<8x32xf32>
    %55 = arith.addf %53, %54 : vector<8x32xf32>
    %56 = math.tanh %55 : vector<8x32xf32>
    %57 = arith.mulf %48, %56 : vector<8x32xf32>
    %c1 = arith.constant 1 : index
    %c0_22 = arith.constant 0 : index
    %c0_23 = arith.constant 0 : index
    %58 = vector.load %arg1[%c1, %c0_22, %c0_23] : memref<8x8x96xf32, #tpu.memory_space<vmem>>, vector<1x8x96xf32>
    %59 = vector.shape_cast %58 : vector<1x8x96xf32> to vector<8x96xf32>
    %c1_24 = arith.constant 1 : index
    %c0_25 = arith.constant 0 : index
    %c0_26 = arith.constant 0 : index
    %60 = vector.load %arg2[%c1_24, %c0_25, %c0_26] : memref<8x8x128xf32, #tpu.memory_space<vmem>>, vector<1x8x128xf32>
    %61 = vector.shape_cast %60 : vector<1x8x128xf32> to vector<8x128xf32>
    %cst_27 = arith.constant dense<0.000000e+00> : vector<8x96xf32>
    %62 = tpu.matmul %37, %3, %cst_27 {dimension_numbers = #tpu.dot_dimension_numbers<[1], [0], [0], [1], [0, 0, 1, 1], [], []>} : vector<8x32xf32>, vector<32x96xf32>, vector<8x96xf32> -> vector<8x96xf32>
    %cst_28 = arith.constant dense<0.000000e+00> : vector<8x128xf32>
    %63 = tpu.matmul %57, %4, %cst_28 {dimension_numbers = #tpu.dot_dimension_numbers<[1], [0], [0], [1], [0, 0, 1, 1], [], []>} : vector<8x32xf32>, vector<32x128xf32>, vector<8x128xf32> -> vector<8x128xf32>
    %64 = vector.extract_strided_slice %59 {offsets = [0, 0], sizes = [8, 64], strides = [1, 1]} : vector<8x96xf32> to vector<8x64xf32>
    %65 = vector.extract_strided_slice %62 {offsets = [0, 0], sizes = [8, 64], strides = [1, 1]} : vector<8x96xf32> to vector<8x64xf32>
    %66 = arith.addf %64, %65 : vector<8x64xf32>
    %67 = arith.negf %66 : vector<8x64xf32>
    %68 = math.exp %67 : vector<8x64xf32>
    %cst_29 = arith.constant 1.000000e+00 : f32
    %69 = vector.broadcast %cst_29 : f32 to vector<8x64xf32>
    %70 = arith.addf %69, %68 : vector<8x64xf32>
    %71 = arith.divf %69, %70 : vector<8x64xf32>
    %72 = vector.extract_strided_slice %71 {offsets = [0, 0], sizes = [8, 32], strides = [1, 1]} : vector<8x64xf32> to vector<8x32xf32>
    %73 = vector.extract_strided_slice %71 {offsets = [0, 32], sizes = [8, 32], strides = [1, 1]} : vector<8x64xf32> to vector<8x32xf32>
    %74 = vector.extract_strided_slice %59 {offsets = [0, 64], sizes = [8, 32], strides = [1, 1]} : vector<8x96xf32> to vector<8x32xf32>
    %75 = vector.extract_strided_slice %62 {offsets = [0, 64], sizes = [8, 32], strides = [1, 1]} : vector<8x96xf32> to vector<8x32xf32>
    %76 = arith.addf %75, %7 : vector<8x32xf32>
    %77 = arith.mulf %72, %76 : vector<8x32xf32>
    %78 = arith.addf %74, %77 : vector<8x32xf32>
    %79 = math.tanh %78 : vector<8x32xf32>
    %cst_30 = arith.constant 1.000000e+00 : f32
    %80 = vector.broadcast %cst_30 : f32 to vector<8x32xf32>
    %81 = arith.subf %80, %73 : vector<8x32xf32>
    %82 = arith.mulf %81, %79 : vector<8x32xf32>
    %83 = arith.mulf %73, %37 : vector<8x32xf32>
    %84 = arith.addf %82, %83 : vector<8x32xf32>
    %85 = vector.extract_strided_slice %61 {offsets = [0, 0], sizes = [8, 96], strides = [1, 1]} : vector<8x128xf32> to vector<8x96xf32>
    %86 = vector.extract_strided_slice %63 {offsets = [0, 0], sizes = [8, 96], strides = [1, 1]} : vector<8x128xf32> to vector<8x96xf32>
    %87 = arith.addf %85, %86 : vector<8x96xf32>
    %88 = arith.negf %87 : vector<8x96xf32>
    %89 = math.exp %88 : vector<8x96xf32>
    %cst_31 = arith.constant 1.000000e+00 : f32
    %90 = vector.broadcast %cst_31 : f32 to vector<8x96xf32>
    %91 = arith.addf %90, %89 : vector<8x96xf32>
    %92 = arith.divf %90, %91 : vector<8x96xf32>
    %93 = vector.extract_strided_slice %92 {offsets = [0, 0], sizes = [8, 32], strides = [1, 1]} : vector<8x96xf32> to vector<8x32xf32>
    %94 = vector.extract_strided_slice %92 {offsets = [0, 32], sizes = [8, 32], strides = [1, 1]} : vector<8x96xf32> to vector<8x32xf32>
    %95 = vector.extract_strided_slice %92 {offsets = [0, 64], sizes = [8, 32], strides = [1, 1]} : vector<8x96xf32> to vector<8x32xf32>
    %96 = vector.extract_strided_slice %61 {offsets = [0, 96], sizes = [8, 32], strides = [1, 1]} : vector<8x128xf32> to vector<8x32xf32>
    %97 = vector.extract_strided_slice %63 {offsets = [0, 96], sizes = [8, 32], strides = [1, 1]} : vector<8x128xf32> to vector<8x32xf32>
    %98 = arith.addf %96, %97 : vector<8x32xf32>
    %99 = math.tanh %98 : vector<8x32xf32>
    %100 = arith.mulf %94, %55 : vector<8x32xf32>
    %101 = arith.mulf %93, %99 : vector<8x32xf32>
    %102 = arith.addf %100, %101 : vector<8x32xf32>
    %103 = math.tanh %102 : vector<8x32xf32>
    %104 = arith.mulf %95, %103 : vector<8x32xf32>
    %c2 = arith.constant 2 : index
    %c0_32 = arith.constant 0 : index
    %c0_33 = arith.constant 0 : index
    %105 = vector.load %arg1[%c2, %c0_32, %c0_33] : memref<8x8x96xf32, #tpu.memory_space<vmem>>, vector<1x8x96xf32>
    %106 = vector.shape_cast %105 : vector<1x8x96xf32> to vector<8x96xf32>
    %c2_34 = arith.constant 2 : index
    %c0_35 = arith.constant 0 : index
    %c0_36 = arith.constant 0 : index
    %107 = vector.load %arg2[%c2_34, %c0_35, %c0_36] : memref<8x8x128xf32, #tpu.memory_space<vmem>>, vector<1x8x128xf32>
    %108 = vector.shape_cast %107 : vector<1x8x128xf32> to vector<8x128xf32>
    %cst_37 = arith.constant dense<0.000000e+00> : vector<8x96xf32>
    %109 = tpu.matmul %84, %3, %cst_37 {dimension_numbers = #tpu.dot_dimension_numbers<[1], [0], [0], [1], [0, 0, 1, 1], [], []>} : vector<8x32xf32>, vector<32x96xf32>, vector<8x96xf32> -> vector<8x96xf32>
    %cst_38 = arith.constant dense<0.000000e+00> : vector<8x128xf32>
    %110 = tpu.matmul %104, %4, %cst_38 {dimension_numbers = #tpu.dot_dimension_numbers<[1], [0], [0], [1], [0, 0, 1, 1], [], []>} : vector<8x32xf32>, vector<32x128xf32>, vector<8x128xf32> -> vector<8x128xf32>
    %111 = vector.extract_strided_slice %106 {offsets = [0, 0], sizes = [8, 64], strides = [1, 1]} : vector<8x96xf32> to vector<8x64xf32>
    %112 = vector.extract_strided_slice %109 {offsets = [0, 0], sizes = [8, 64], strides = [1, 1]} : vector<8x96xf32> to vector<8x64xf32>
    %113 = arith.addf %111, %112 : vector<8x64xf32>
    %114 = arith.negf %113 : vector<8x64xf32>
    %115 = math.exp %114 : vector<8x64xf32>
    %cst_39 = arith.constant 1.000000e+00 : f32
    %116 = vector.broadcast %cst_39 : f32 to vector<8x64xf32>
    %117 = arith.addf %116, %115 : vector<8x64xf32>
    %118 = arith.divf %116, %117 : vector<8x64xf32>
    %119 = vector.extract_strided_slice %118 {offsets = [0, 0], sizes = [8, 32], strides = [1, 1]} : vector<8x64xf32> to vector<8x32xf32>
    %120 = vector.extract_strided_slice %118 {offsets = [0, 32], sizes = [8, 32], strides = [1, 1]} : vector<8x64xf32> to vector<8x32xf32>
    %121 = vector.extract_strided_slice %106 {offsets = [0, 64], sizes = [8, 32], strides = [1, 1]} : vector<8x96xf32> to vector<8x32xf32>
    %122 = vector.extract_strided_slice %109 {offsets = [0, 64], sizes = [8, 32], strides = [1, 1]} : vector<8x96xf32> to vector<8x32xf32>
    %123 = arith.addf %122, %7 : vector<8x32xf32>
    %124 = arith.mulf %119, %123 : vector<8x32xf32>
    %125 = arith.addf %121, %124 : vector<8x32xf32>
    %126 = math.tanh %125 : vector<8x32xf32>
    %cst_40 = arith.constant 1.000000e+00 : f32
    %127 = vector.broadcast %cst_40 : f32 to vector<8x32xf32>
    %128 = arith.subf %127, %120 : vector<8x32xf32>
    %129 = arith.mulf %128, %126 : vector<8x32xf32>
    %130 = arith.mulf %120, %84 : vector<8x32xf32>
    %131 = arith.addf %129, %130 : vector<8x32xf32>
    %132 = vector.extract_strided_slice %108 {offsets = [0, 0], sizes = [8, 96], strides = [1, 1]} : vector<8x128xf32> to vector<8x96xf32>
    %133 = vector.extract_strided_slice %110 {offsets = [0, 0], sizes = [8, 96], strides = [1, 1]} : vector<8x128xf32> to vector<8x96xf32>
    %134 = arith.addf %132, %133 : vector<8x96xf32>
    %135 = arith.negf %134 : vector<8x96xf32>
    %136 = math.exp %135 : vector<8x96xf32>
    %cst_41 = arith.constant 1.000000e+00 : f32
    %137 = vector.broadcast %cst_41 : f32 to vector<8x96xf32>
    %138 = arith.addf %137, %136 : vector<8x96xf32>
    %139 = arith.divf %137, %138 : vector<8x96xf32>
    %140 = vector.extract_strided_slice %139 {offsets = [0, 0], sizes = [8, 32], strides = [1, 1]} : vector<8x96xf32> to vector<8x32xf32>
    %141 = vector.extract_strided_slice %139 {offsets = [0, 32], sizes = [8, 32], strides = [1, 1]} : vector<8x96xf32> to vector<8x32xf32>
    %142 = vector.extract_strided_slice %139 {offsets = [0, 64], sizes = [8, 32], strides = [1, 1]} : vector<8x96xf32> to vector<8x32xf32>
    %143 = vector.extract_strided_slice %108 {offsets = [0, 96], sizes = [8, 32], strides = [1, 1]} : vector<8x128xf32> to vector<8x32xf32>
    %144 = vector.extract_strided_slice %110 {offsets = [0, 96], sizes = [8, 32], strides = [1, 1]} : vector<8x128xf32> to vector<8x32xf32>
    %145 = arith.addf %143, %144 : vector<8x32xf32>
    %146 = math.tanh %145 : vector<8x32xf32>
    %147 = arith.mulf %141, %102 : vector<8x32xf32>
    %148 = arith.mulf %140, %146 : vector<8x32xf32>
    %149 = arith.addf %147, %148 : vector<8x32xf32>
    %150 = math.tanh %149 : vector<8x32xf32>
    %151 = arith.mulf %142, %150 : vector<8x32xf32>
    %c3 = arith.constant 3 : index
    %c0_42 = arith.constant 0 : index
    %c0_43 = arith.constant 0 : index
    %152 = vector.load %arg1[%c3, %c0_42, %c0_43] : memref<8x8x96xf32, #tpu.memory_space<vmem>>, vector<1x8x96xf32>
    %153 = vector.shape_cast %152 : vector<1x8x96xf32> to vector<8x96xf32>
    %c3_44 = arith.constant 3 : index
    %c0_45 = arith.constant 0 : index
    %c0_46 = arith.constant 0 : index
    %154 = vector.load %arg2[%c3_44, %c0_45, %c0_46] : memref<8x8x128xf32, #tpu.memory_space<vmem>>, vector<1x8x128xf32>
    %155 = vector.shape_cast %154 : vector<1x8x128xf32> to vector<8x128xf32>
    %cst_47 = arith.constant dense<0.000000e+00> : vector<8x96xf32>
    %156 = tpu.matmul %131, %3, %cst_47 {dimension_numbers = #tpu.dot_dimension_numbers<[1], [0], [0], [1], [0, 0, 1, 1], [], []>} : vector<8x32xf32>, vector<32x96xf32>, vector<8x96xf32> -> vector<8x96xf32>
    %cst_48 = arith.constant dense<0.000000e+00> : vector<8x128xf32>
    %157 = tpu.matmul %151, %4, %cst_48 {dimension_numbers = #tpu.dot_dimension_numbers<[1], [0], [0], [1], [0, 0, 1, 1], [], []>} : vector<8x32xf32>, vector<32x128xf32>, vector<8x128xf32> -> vector<8x128xf32>
    %158 = vector.extract_strided_slice %153 {offsets = [0, 0], sizes = [8, 64], strides = [1, 1]} : vector<8x96xf32> to vector<8x64xf32>
    %159 = vector.extract_strided_slice %156 {offsets = [0, 0], sizes = [8, 64], strides = [1, 1]} : vector<8x96xf32> to vector<8x64xf32>
    %160 = arith.addf %158, %159 : vector<8x64xf32>
    %161 = arith.negf %160 : vector<8x64xf32>
    %162 = math.exp %161 : vector<8x64xf32>
    %cst_49 = arith.constant 1.000000e+00 : f32
    %163 = vector.broadcast %cst_49 : f32 to vector<8x64xf32>
    %164 = arith.addf %163, %162 : vector<8x64xf32>
    %165 = arith.divf %163, %164 : vector<8x64xf32>
    %166 = vector.extract_strided_slice %165 {offsets = [0, 0], sizes = [8, 32], strides = [1, 1]} : vector<8x64xf32> to vector<8x32xf32>
    %167 = vector.extract_strided_slice %165 {offsets = [0, 32], sizes = [8, 32], strides = [1, 1]} : vector<8x64xf32> to vector<8x32xf32>
    %168 = vector.extract_strided_slice %153 {offsets = [0, 64], sizes = [8, 32], strides = [1, 1]} : vector<8x96xf32> to vector<8x32xf32>
    %169 = vector.extract_strided_slice %156 {offsets = [0, 64], sizes = [8, 32], strides = [1, 1]} : vector<8x96xf32> to vector<8x32xf32>
    %170 = arith.addf %169, %7 : vector<8x32xf32>
    %171 = arith.mulf %166, %170 : vector<8x32xf32>
    %172 = arith.addf %168, %171 : vector<8x32xf32>
    %173 = math.tanh %172 : vector<8x32xf32>
    %cst_50 = arith.constant 1.000000e+00 : f32
    %174 = vector.broadcast %cst_50 : f32 to vector<8x32xf32>
    %175 = arith.subf %174, %167 : vector<8x32xf32>
    %176 = arith.mulf %175, %173 : vector<8x32xf32>
    %177 = arith.mulf %167, %131 : vector<8x32xf32>
    %178 = arith.addf %176, %177 : vector<8x32xf32>
    %179 = vector.extract_strided_slice %155 {offsets = [0, 0], sizes = [8, 96], strides = [1, 1]} : vector<8x128xf32> to vector<8x96xf32>
    %180 = vector.extract_strided_slice %157 {offsets = [0, 0], sizes = [8, 96], strides = [1, 1]} : vector<8x128xf32> to vector<8x96xf32>
    %181 = arith.addf %179, %180 : vector<8x96xf32>
    %182 = arith.negf %181 : vector<8x96xf32>
    %183 = math.exp %182 : vector<8x96xf32>
    %cst_51 = arith.constant 1.000000e+00 : f32
    %184 = vector.broadcast %cst_51 : f32 to vector<8x96xf32>
    %185 = arith.addf %184, %183 : vector<8x96xf32>
    %186 = arith.divf %184, %185 : vector<8x96xf32>
    %187 = vector.extract_strided_slice %186 {offsets = [0, 0], sizes = [8, 32], strides = [1, 1]} : vector<8x96xf32> to vector<8x32xf32>
    %188 = vector.extract_strided_slice %186 {offsets = [0, 32], sizes = [8, 32], strides = [1, 1]} : vector<8x96xf32> to vector<8x32xf32>
    %189 = vector.extract_strided_slice %186 {offsets = [0, 64], sizes = [8, 32], strides = [1, 1]} : vector<8x96xf32> to vector<8x32xf32>
    %190 = vector.extract_strided_slice %155 {offsets = [0, 96], sizes = [8, 32], strides = [1, 1]} : vector<8x128xf32> to vector<8x32xf32>
    %191 = vector.extract_strided_slice %157 {offsets = [0, 96], sizes = [8, 32], strides = [1, 1]} : vector<8x128xf32> to vector<8x32xf32>
    %192 = arith.addf %190, %191 : vector<8x32xf32>
    %193 = math.tanh %192 : vector<8x32xf32>
    %194 = arith.mulf %188, %149 : vector<8x32xf32>
    %195 = arith.mulf %187, %193 : vector<8x32xf32>
    %196 = arith.addf %194, %195 : vector<8x32xf32>
    %197 = math.tanh %196 : vector<8x32xf32>
    %198 = arith.mulf %189, %197 : vector<8x32xf32>
    %c4 = arith.constant 4 : index
    %c0_52 = arith.constant 0 : index
    %c0_53 = arith.constant 0 : index
    %199 = vector.load %arg1[%c4, %c0_52, %c0_53] : memref<8x8x96xf32, #tpu.memory_space<vmem>>, vector<1x8x96xf32>
    %200 = vector.shape_cast %199 : vector<1x8x96xf32> to vector<8x96xf32>
    %c4_54 = arith.constant 4 : index
    %c0_55 = arith.constant 0 : index
    %c0_56 = arith.constant 0 : index
    %201 = vector.load %arg2[%c4_54, %c0_55, %c0_56] : memref<8x8x128xf32, #tpu.memory_space<vmem>>, vector<1x8x128xf32>
    %202 = vector.shape_cast %201 : vector<1x8x128xf32> to vector<8x128xf32>
    %cst_57 = arith.constant dense<0.000000e+00> : vector<8x96xf32>
    %203 = tpu.matmul %178, %3, %cst_57 {dimension_numbers = #tpu.dot_dimension_numbers<[1], [0], [0], [1], [0, 0, 1, 1], [], []>} : vector<8x32xf32>, vector<32x96xf32>, vector<8x96xf32> -> vector<8x96xf32>
    %cst_58 = arith.constant dense<0.000000e+00> : vector<8x128xf32>
    %204 = tpu.matmul %198, %4, %cst_58 {dimension_numbers = #tpu.dot_dimension_numbers<[1], [0], [0], [1], [0, 0, 1, 1], [], []>} : vector<8x32xf32>, vector<32x128xf32>, vector<8x128xf32> -> vector<8x128xf32>
    %205 = vector.extract_strided_slice %200 {offsets = [0, 0], sizes = [8, 64], strides = [1, 1]} : vector<8x96xf32> to vector<8x64xf32>
    %206 = vector.extract_strided_slice %203 {offsets = [0, 0], sizes = [8, 64], strides = [1, 1]} : vector<8x96xf32> to vector<8x64xf32>
    %207 = arith.addf %205, %206 : vector<8x64xf32>
    %208 = arith.negf %207 : vector<8x64xf32>
    %209 = math.exp %208 : vector<8x64xf32>
    %cst_59 = arith.constant 1.000000e+00 : f32
    %210 = vector.broadcast %cst_59 : f32 to vector<8x64xf32>
    %211 = arith.addf %210, %209 : vector<8x64xf32>
    %212 = arith.divf %210, %211 : vector<8x64xf32>
    %213 = vector.extract_strided_slice %212 {offsets = [0, 0], sizes = [8, 32], strides = [1, 1]} : vector<8x64xf32> to vector<8x32xf32>
    %214 = vector.extract_strided_slice %212 {offsets = [0, 32], sizes = [8, 32], strides = [1, 1]} : vector<8x64xf32> to vector<8x32xf32>
    %215 = vector.extract_strided_slice %200 {offsets = [0, 64], sizes = [8, 32], strides = [1, 1]} : vector<8x96xf32> to vector<8x32xf32>
    %216 = vector.extract_strided_slice %203 {offsets = [0, 64], sizes = [8, 32], strides = [1, 1]} : vector<8x96xf32> to vector<8x32xf32>
    %217 = arith.addf %216, %7 : vector<8x32xf32>
    %218 = arith.mulf %213, %217 : vector<8x32xf32>
    %219 = arith.addf %215, %218 : vector<8x32xf32>
    %220 = math.tanh %219 : vector<8x32xf32>
    %cst_60 = arith.constant 1.000000e+00 : f32
    %221 = vector.broadcast %cst_60 : f32 to vector<8x32xf32>
    %222 = arith.subf %221, %214 : vector<8x32xf32>
    %223 = arith.mulf %222, %220 : vector<8x32xf32>
    %224 = arith.mulf %214, %178 : vector<8x32xf32>
    %225 = arith.addf %223, %224 : vector<8x32xf32>
    %226 = vector.extract_strided_slice %202 {offsets = [0, 0], sizes = [8, 96], strides = [1, 1]} : vector<8x128xf32> to vector<8x96xf32>
    %227 = vector.extract_strided_slice %204 {offsets = [0, 0], sizes = [8, 96], strides = [1, 1]} : vector<8x128xf32> to vector<8x96xf32>
    %228 = arith.addf %226, %227 : vector<8x96xf32>
    %229 = arith.negf %228 : vector<8x96xf32>
    %230 = math.exp %229 : vector<8x96xf32>
    %cst_61 = arith.constant 1.000000e+00 : f32
    %231 = vector.broadcast %cst_61 : f32 to vector<8x96xf32>
    %232 = arith.addf %231, %230 : vector<8x96xf32>
    %233 = arith.divf %231, %232 : vector<8x96xf32>
    %234 = vector.extract_strided_slice %233 {offsets = [0, 0], sizes = [8, 32], strides = [1, 1]} : vector<8x96xf32> to vector<8x32xf32>
    %235 = vector.extract_strided_slice %233 {offsets = [0, 32], sizes = [8, 32], strides = [1, 1]} : vector<8x96xf32> to vector<8x32xf32>
    %236 = vector.extract_strided_slice %233 {offsets = [0, 64], sizes = [8, 32], strides = [1, 1]} : vector<8x96xf32> to vector<8x32xf32>
    %237 = vector.extract_strided_slice %202 {offsets = [0, 96], sizes = [8, 32], strides = [1, 1]} : vector<8x128xf32> to vector<8x32xf32>
    %238 = vector.extract_strided_slice %204 {offsets = [0, 96], sizes = [8, 32], strides = [1, 1]} : vector<8x128xf32> to vector<8x32xf32>
    %239 = arith.addf %237, %238 : vector<8x32xf32>
    %240 = math.tanh %239 : vector<8x32xf32>
    %241 = arith.mulf %235, %196 : vector<8x32xf32>
    %242 = arith.mulf %234, %240 : vector<8x32xf32>
    %243 = arith.addf %241, %242 : vector<8x32xf32>
    %244 = math.tanh %243 : vector<8x32xf32>
    %245 = arith.mulf %236, %244 : vector<8x32xf32>
    %c5 = arith.constant 5 : index
    %c0_62 = arith.constant 0 : index
    %c0_63 = arith.constant 0 : index
    %246 = vector.load %arg1[%c5, %c0_62, %c0_63] : memref<8x8x96xf32, #tpu.memory_space<vmem>>, vector<1x8x96xf32>
    %247 = vector.shape_cast %246 : vector<1x8x96xf32> to vector<8x96xf32>
    %c5_64 = arith.constant 5 : index
    %c0_65 = arith.constant 0 : index
    %c0_66 = arith.constant 0 : index
    %248 = vector.load %arg2[%c5_64, %c0_65, %c0_66] : memref<8x8x128xf32, #tpu.memory_space<vmem>>, vector<1x8x128xf32>
    %249 = vector.shape_cast %248 : vector<1x8x128xf32> to vector<8x128xf32>
    %cst_67 = arith.constant dense<0.000000e+00> : vector<8x96xf32>
    %250 = tpu.matmul %225, %3, %cst_67 {dimension_numbers = #tpu.dot_dimension_numbers<[1], [0], [0], [1], [0, 0, 1, 1], [], []>} : vector<8x32xf32>, vector<32x96xf32>, vector<8x96xf32> -> vector<8x96xf32>
    %cst_68 = arith.constant dense<0.000000e+00> : vector<8x128xf32>
    %251 = tpu.matmul %245, %4, %cst_68 {dimension_numbers = #tpu.dot_dimension_numbers<[1], [0], [0], [1], [0, 0, 1, 1], [], []>} : vector<8x32xf32>, vector<32x128xf32>, vector<8x128xf32> -> vector<8x128xf32>
    %252 = vector.extract_strided_slice %247 {offsets = [0, 0], sizes = [8, 64], strides = [1, 1]} : vector<8x96xf32> to vector<8x64xf32>
    %253 = vector.extract_strided_slice %250 {offsets = [0, 0], sizes = [8, 64], strides = [1, 1]} : vector<8x96xf32> to vector<8x64xf32>
    %254 = arith.addf %252, %253 : vector<8x64xf32>
    %255 = arith.negf %254 : vector<8x64xf32>
    %256 = math.exp %255 : vector<8x64xf32>
    %cst_69 = arith.constant 1.000000e+00 : f32
    %257 = vector.broadcast %cst_69 : f32 to vector<8x64xf32>
    %258 = arith.addf %257, %256 : vector<8x64xf32>
    %259 = arith.divf %257, %258 : vector<8x64xf32>
    %260 = vector.extract_strided_slice %259 {offsets = [0, 0], sizes = [8, 32], strides = [1, 1]} : vector<8x64xf32> to vector<8x32xf32>
    %261 = vector.extract_strided_slice %259 {offsets = [0, 32], sizes = [8, 32], strides = [1, 1]} : vector<8x64xf32> to vector<8x32xf32>
    %262 = vector.extract_strided_slice %247 {offsets = [0, 64], sizes = [8, 32], strides = [1, 1]} : vector<8x96xf32> to vector<8x32xf32>
    %263 = vector.extract_strided_slice %250 {offsets = [0, 64], sizes = [8, 32], strides = [1, 1]} : vector<8x96xf32> to vector<8x32xf32>
    %264 = arith.addf %263, %7 : vector<8x32xf32>
    %265 = arith.mulf %260, %264 : vector<8x32xf32>
    %266 = arith.addf %262, %265 : vector<8x32xf32>
    %267 = math.tanh %266 : vector<8x32xf32>
    %cst_70 = arith.constant 1.000000e+00 : f32
    %268 = vector.broadcast %cst_70 : f32 to vector<8x32xf32>
    %269 = arith.subf %268, %261 : vector<8x32xf32>
    %270 = arith.mulf %269, %267 : vector<8x32xf32>
    %271 = arith.mulf %261, %225 : vector<8x32xf32>
    %272 = arith.addf %270, %271 : vector<8x32xf32>
    %273 = vector.extract_strided_slice %249 {offsets = [0, 0], sizes = [8, 96], strides = [1, 1]} : vector<8x128xf32> to vector<8x96xf32>
    %274 = vector.extract_strided_slice %251 {offsets = [0, 0], sizes = [8, 96], strides = [1, 1]} : vector<8x128xf32> to vector<8x96xf32>
    %275 = arith.addf %273, %274 : vector<8x96xf32>
    %276 = arith.negf %275 : vector<8x96xf32>
    %277 = math.exp %276 : vector<8x96xf32>
    %cst_71 = arith.constant 1.000000e+00 : f32
    %278 = vector.broadcast %cst_71 : f32 to vector<8x96xf32>
    %279 = arith.addf %278, %277 : vector<8x96xf32>
    %280 = arith.divf %278, %279 : vector<8x96xf32>
    %281 = vector.extract_strided_slice %280 {offsets = [0, 0], sizes = [8, 32], strides = [1, 1]} : vector<8x96xf32> to vector<8x32xf32>
    %282 = vector.extract_strided_slice %280 {offsets = [0, 32], sizes = [8, 32], strides = [1, 1]} : vector<8x96xf32> to vector<8x32xf32>
    %283 = vector.extract_strided_slice %280 {offsets = [0, 64], sizes = [8, 32], strides = [1, 1]} : vector<8x96xf32> to vector<8x32xf32>
    %284 = vector.extract_strided_slice %249 {offsets = [0, 96], sizes = [8, 32], strides = [1, 1]} : vector<8x128xf32> to vector<8x32xf32>
    %285 = vector.extract_strided_slice %251 {offsets = [0, 96], sizes = [8, 32], strides = [1, 1]} : vector<8x128xf32> to vector<8x32xf32>
    %286 = arith.addf %284, %285 : vector<8x32xf32>
    %287 = math.tanh %286 : vector<8x32xf32>
    %288 = arith.mulf %282, %243 : vector<8x32xf32>
    %289 = arith.mulf %281, %287 : vector<8x32xf32>
    %290 = arith.addf %288, %289 : vector<8x32xf32>
    %291 = math.tanh %290 : vector<8x32xf32>
    %292 = arith.mulf %283, %291 : vector<8x32xf32>
    %c6 = arith.constant 6 : index
    %c0_72 = arith.constant 0 : index
    %c0_73 = arith.constant 0 : index
    %293 = vector.load %arg1[%c6, %c0_72, %c0_73] : memref<8x8x96xf32, #tpu.memory_space<vmem>>, vector<1x8x96xf32>
    %294 = vector.shape_cast %293 : vector<1x8x96xf32> to vector<8x96xf32>
    %c6_74 = arith.constant 6 : index
    %c0_75 = arith.constant 0 : index
    %c0_76 = arith.constant 0 : index
    %295 = vector.load %arg2[%c6_74, %c0_75, %c0_76] : memref<8x8x128xf32, #tpu.memory_space<vmem>>, vector<1x8x128xf32>
    %296 = vector.shape_cast %295 : vector<1x8x128xf32> to vector<8x128xf32>
    %cst_77 = arith.constant dense<0.000000e+00> : vector<8x96xf32>
    %297 = tpu.matmul %272, %3, %cst_77 {dimension_numbers = #tpu.dot_dimension_numbers<[1], [0], [0], [1], [0, 0, 1, 1], [], []>} : vector<8x32xf32>, vector<32x96xf32>, vector<8x96xf32> -> vector<8x96xf32>
    %cst_78 = arith.constant dense<0.000000e+00> : vector<8x128xf32>
    %298 = tpu.matmul %292, %4, %cst_78 {dimension_numbers = #tpu.dot_dimension_numbers<[1], [0], [0], [1], [0, 0, 1, 1], [], []>} : vector<8x32xf32>, vector<32x128xf32>, vector<8x128xf32> -> vector<8x128xf32>
    %299 = vector.extract_strided_slice %294 {offsets = [0, 0], sizes = [8, 64], strides = [1, 1]} : vector<8x96xf32> to vector<8x64xf32>
    %300 = vector.extract_strided_slice %297 {offsets = [0, 0], sizes = [8, 64], strides = [1, 1]} : vector<8x96xf32> to vector<8x64xf32>
    %301 = arith.addf %299, %300 : vector<8x64xf32>
    %302 = arith.negf %301 : vector<8x64xf32>
    %303 = math.exp %302 : vector<8x64xf32>
    %cst_79 = arith.constant 1.000000e+00 : f32
    %304 = vector.broadcast %cst_79 : f32 to vector<8x64xf32>
    %305 = arith.addf %304, %303 : vector<8x64xf32>
    %306 = arith.divf %304, %305 : vector<8x64xf32>
    %307 = vector.extract_strided_slice %306 {offsets = [0, 0], sizes = [8, 32], strides = [1, 1]} : vector<8x64xf32> to vector<8x32xf32>
    %308 = vector.extract_strided_slice %306 {offsets = [0, 32], sizes = [8, 32], strides = [1, 1]} : vector<8x64xf32> to vector<8x32xf32>
    %309 = vector.extract_strided_slice %294 {offsets = [0, 64], sizes = [8, 32], strides = [1, 1]} : vector<8x96xf32> to vector<8x32xf32>
    %310 = vector.extract_strided_slice %297 {offsets = [0, 64], sizes = [8, 32], strides = [1, 1]} : vector<8x96xf32> to vector<8x32xf32>
    %311 = arith.addf %310, %7 : vector<8x32xf32>
    %312 = arith.mulf %307, %311 : vector<8x32xf32>
    %313 = arith.addf %309, %312 : vector<8x32xf32>
    %314 = math.tanh %313 : vector<8x32xf32>
    %cst_80 = arith.constant 1.000000e+00 : f32
    %315 = vector.broadcast %cst_80 : f32 to vector<8x32xf32>
    %316 = arith.subf %315, %308 : vector<8x32xf32>
    %317 = arith.mulf %316, %314 : vector<8x32xf32>
    %318 = arith.mulf %308, %272 : vector<8x32xf32>
    %319 = arith.addf %317, %318 : vector<8x32xf32>
    %320 = vector.extract_strided_slice %296 {offsets = [0, 0], sizes = [8, 96], strides = [1, 1]} : vector<8x128xf32> to vector<8x96xf32>
    %321 = vector.extract_strided_slice %298 {offsets = [0, 0], sizes = [8, 96], strides = [1, 1]} : vector<8x128xf32> to vector<8x96xf32>
    %322 = arith.addf %320, %321 : vector<8x96xf32>
    %323 = arith.negf %322 : vector<8x96xf32>
    %324 = math.exp %323 : vector<8x96xf32>
    %cst_81 = arith.constant 1.000000e+00 : f32
    %325 = vector.broadcast %cst_81 : f32 to vector<8x96xf32>
    %326 = arith.addf %325, %324 : vector<8x96xf32>
    %327 = arith.divf %325, %326 : vector<8x96xf32>
    %328 = vector.extract_strided_slice %327 {offsets = [0, 0], sizes = [8, 32], strides = [1, 1]} : vector<8x96xf32> to vector<8x32xf32>
    %329 = vector.extract_strided_slice %327 {offsets = [0, 32], sizes = [8, 32], strides = [1, 1]} : vector<8x96xf32> to vector<8x32xf32>
    %330 = vector.extract_strided_slice %327 {offsets = [0, 64], sizes = [8, 32], strides = [1, 1]} : vector<8x96xf32> to vector<8x32xf32>
    %331 = vector.extract_strided_slice %296 {offsets = [0, 96], sizes = [8, 32], strides = [1, 1]} : vector<8x128xf32> to vector<8x32xf32>
    %332 = vector.extract_strided_slice %298 {offsets = [0, 96], sizes = [8, 32], strides = [1, 1]} : vector<8x128xf32> to vector<8x32xf32>
    %333 = arith.addf %331, %332 : vector<8x32xf32>
    %334 = math.tanh %333 : vector<8x32xf32>
    %335 = arith.mulf %329, %290 : vector<8x32xf32>
    %336 = arith.mulf %328, %334 : vector<8x32xf32>
    %337 = arith.addf %335, %336 : vector<8x32xf32>
    %338 = math.tanh %337 : vector<8x32xf32>
    %339 = arith.mulf %330, %338 : vector<8x32xf32>
    %c7 = arith.constant 7 : index
    %c0_82 = arith.constant 0 : index
    %c0_83 = arith.constant 0 : index
    %340 = vector.load %arg1[%c7, %c0_82, %c0_83] : memref<8x8x96xf32, #tpu.memory_space<vmem>>, vector<1x8x96xf32>
    %341 = vector.shape_cast %340 : vector<1x8x96xf32> to vector<8x96xf32>
    %c7_84 = arith.constant 7 : index
    %c0_85 = arith.constant 0 : index
    %c0_86 = arith.constant 0 : index
    %342 = vector.load %arg2[%c7_84, %c0_85, %c0_86] : memref<8x8x128xf32, #tpu.memory_space<vmem>>, vector<1x8x128xf32>
    %343 = vector.shape_cast %342 : vector<1x8x128xf32> to vector<8x128xf32>
    %cst_87 = arith.constant dense<0.000000e+00> : vector<8x96xf32>
    %344 = tpu.matmul %319, %3, %cst_87 {dimension_numbers = #tpu.dot_dimension_numbers<[1], [0], [0], [1], [0, 0, 1, 1], [], []>} : vector<8x32xf32>, vector<32x96xf32>, vector<8x96xf32> -> vector<8x96xf32>
    %cst_88 = arith.constant dense<0.000000e+00> : vector<8x128xf32>
    %345 = tpu.matmul %339, %4, %cst_88 {dimension_numbers = #tpu.dot_dimension_numbers<[1], [0], [0], [1], [0, 0, 1, 1], [], []>} : vector<8x32xf32>, vector<32x128xf32>, vector<8x128xf32> -> vector<8x128xf32>
    %346 = vector.extract_strided_slice %341 {offsets = [0, 0], sizes = [8, 64], strides = [1, 1]} : vector<8x96xf32> to vector<8x64xf32>
    %347 = vector.extract_strided_slice %344 {offsets = [0, 0], sizes = [8, 64], strides = [1, 1]} : vector<8x96xf32> to vector<8x64xf32>
    %348 = arith.addf %346, %347 : vector<8x64xf32>
    %349 = arith.negf %348 : vector<8x64xf32>
    %350 = math.exp %349 : vector<8x64xf32>
    %cst_89 = arith.constant 1.000000e+00 : f32
    %351 = vector.broadcast %cst_89 : f32 to vector<8x64xf32>
    %352 = arith.addf %351, %350 : vector<8x64xf32>
    %353 = arith.divf %351, %352 : vector<8x64xf32>
    %354 = vector.extract_strided_slice %353 {offsets = [0, 0], sizes = [8, 32], strides = [1, 1]} : vector<8x64xf32> to vector<8x32xf32>
    %355 = vector.extract_strided_slice %353 {offsets = [0, 32], sizes = [8, 32], strides = [1, 1]} : vector<8x64xf32> to vector<8x32xf32>
    %356 = vector.extract_strided_slice %341 {offsets = [0, 64], sizes = [8, 32], strides = [1, 1]} : vector<8x96xf32> to vector<8x32xf32>
    %357 = vector.extract_strided_slice %344 {offsets = [0, 64], sizes = [8, 32], strides = [1, 1]} : vector<8x96xf32> to vector<8x32xf32>
    %358 = arith.addf %357, %7 : vector<8x32xf32>
    %359 = arith.mulf %354, %358 : vector<8x32xf32>
    %360 = arith.addf %356, %359 : vector<8x32xf32>
    %361 = math.tanh %360 : vector<8x32xf32>
    %cst_90 = arith.constant 1.000000e+00 : f32
    %362 = vector.broadcast %cst_90 : f32 to vector<8x32xf32>
    %363 = arith.subf %362, %355 : vector<8x32xf32>
    %364 = arith.mulf %363, %361 : vector<8x32xf32>
    %365 = arith.mulf %355, %319 : vector<8x32xf32>
    %366 = arith.addf %364, %365 : vector<8x32xf32>
    %367 = vector.extract_strided_slice %343 {offsets = [0, 0], sizes = [8, 96], strides = [1, 1]} : vector<8x128xf32> to vector<8x96xf32>
    %368 = vector.extract_strided_slice %345 {offsets = [0, 0], sizes = [8, 96], strides = [1, 1]} : vector<8x128xf32> to vector<8x96xf32>
    %369 = arith.addf %367, %368 : vector<8x96xf32>
    %370 = arith.negf %369 : vector<8x96xf32>
    %371 = math.exp %370 : vector<8x96xf32>
    %cst_91 = arith.constant 1.000000e+00 : f32
    %372 = vector.broadcast %cst_91 : f32 to vector<8x96xf32>
    %373 = arith.addf %372, %371 : vector<8x96xf32>
    %374 = arith.divf %372, %373 : vector<8x96xf32>
    %375 = vector.extract_strided_slice %374 {offsets = [0, 0], sizes = [8, 32], strides = [1, 1]} : vector<8x96xf32> to vector<8x32xf32>
    %376 = vector.extract_strided_slice %374 {offsets = [0, 32], sizes = [8, 32], strides = [1, 1]} : vector<8x96xf32> to vector<8x32xf32>
    %377 = vector.extract_strided_slice %374 {offsets = [0, 64], sizes = [8, 32], strides = [1, 1]} : vector<8x96xf32> to vector<8x32xf32>
    %378 = vector.extract_strided_slice %343 {offsets = [0, 96], sizes = [8, 32], strides = [1, 1]} : vector<8x128xf32> to vector<8x32xf32>
    %379 = vector.extract_strided_slice %345 {offsets = [0, 96], sizes = [8, 32], strides = [1, 1]} : vector<8x128xf32> to vector<8x32xf32>
    %380 = arith.addf %378, %379 : vector<8x32xf32>
    %381 = math.tanh %380 : vector<8x32xf32>
    %382 = arith.mulf %376, %337 : vector<8x32xf32>
    %383 = arith.mulf %375, %381 : vector<8x32xf32>
    %384 = arith.addf %382, %383 : vector<8x32xf32>
    %385 = math.tanh %384 : vector<8x32xf32>
    %386 = arith.mulf %377, %385 : vector<8x32xf32>
    %c0_92 = arith.constant 0 : index
    %c0_93 = arith.constant 0 : index
    %387 = vector.load %arg8[%c0_92, %c0_93] : memref<8x32xf32, #tpu.memory_space<vmem>>, vector<8x32xf32>
    tpu.vector_store %arg8[%c0_92, %c0_93], %366 {strides = array<i32>} : memref<8x32xf32, #tpu.memory_space<vmem>>, vector<8x32xf32>,
    %c0_94 = arith.constant 0 : index
    %c0_95 = arith.constant 0 : index
    %388 = vector.load %arg9[%c0_94, %c0_95] : memref<8x32xf32, #tpu.memory_space<vmem>>, vector<8x32xf32>
    tpu.vector_store %arg9[%c0_94, %c0_95], %386 {strides = array<i32>} : memref<8x32xf32, #tpu.memory_space<vmem>>, vector<8x32xf32>,
    %c0_96 = arith.constant 0 : index
    %c0_97 = arith.constant 0 : index
    %389 = vector.load %arg10[%c0_96, %c0_97] : memref<8x32xf32, #tpu.memory_space<vmem>>, vector<8x32xf32>
    tpu.vector_store %arg10[%c0_96, %c0_97], %384 {strides = array<i32>} : memref<8x32xf32, #tpu.memory_space<vmem>>, vector<8x32xf32>,
    %390 = tpu.concatenate %37, %84, %131, %178, %225, %272, %319, %366 in 1 : vector<8x32xf32>, vector<8x32xf32>, vector<8x32xf32>, vector<8x32xf32>, vector<8x32xf32>, vector<8x32xf32>, vector<8x32xf32>, vector<8x32xf32> -> vector<8x256xf32>
    %c0_98 = arith.constant 0 : index
    %c0_99 = arith.constant 0 : index
    %c0_100 = arith.constant 0 : index
    %391 = vector.load %arg6[%c0_98, %c0_99, %c0_100] : memref<1x8x256xf32, #tpu.memory_space<vmem>>, vector<1x8x256xf32>
    %392 = vector.shape_cast %391 : vector<1x8x256xf32> to vector<8x256xf32>
    %393 = vector.shape_cast %390 : vector<8x256xf32> to vector<1x8x256xf32>
    tpu.vector_store %arg6[%c0_98, %c0_99, %c0_100], %393 {strides = array<i32>} : memref<1x8x256xf32, #tpu.memory_space<vmem>>, vector<1x8x256xf32>,
    %394 = tpu.concatenate %57, %104, %151, %198, %245, %292, %339, %386 in 1 : vector<8x32xf32>, vector<8x32xf32>, vector<8x32xf32>, vector<8x32xf32>, vector<8x32xf32>, vector<8x32xf32>, vector<8x32xf32>, vector<8x32xf32> -> vector<8x256xf32>
    %c0_101 = arith.constant 0 : index
    %c0_102 = arith.constant 0 : index
    %c0_103 = arith.constant 0 : index
    %395 = vector.load %arg7[%c0_101, %c0_102, %c0_103] : memref<1x8x256xf32, #tpu.memory_space<vmem>>, vector<1x8x256xf32>
    %396 = vector.shape_cast %395 : vector<1x8x256xf32> to vector<8x256xf32>
    %397 = vector.shape_cast %394 : vector<8x256xf32> to vector<1x8x256xf32>
    tpu.vector_store %arg7[%c0_101, %c0_102, %c0_103], %397 {strides = array<i32>} : memref<1x8x256xf32, #tpu.memory_space<vmem>>, vector<1x8x256xf32>,
    return
  }
  func.func @transform_0(%arg0: i32) -> (i32, i32, i32) {
    %c0_i32 = arith.constant 0 : i32
    %c0_i32_0 = arith.constant 0 : i32
    %c0_i32_1 = arith.constant 0 : i32
    return %arg0, %c0_i32, %c0_i32_0 : i32, i32, i32
  }
  func.func @transform_1(%arg0: i32) -> (i32, i32, i32) {
    %c0_i32 = arith.constant 0 : i32
    %c0_i32_0 = arith.constant 0 : i32
    %c0_i32_1 = arith.constant 0 : i32
    return %arg0, %c0_i32, %c0_i32_0 : i32, i32, i32
  }
  func.func @transform_2(%arg0: i32) -> (i32, i32) {
    %c0_i32 = arith.constant 0 : i32
    %c0_i32_0 = arith.constant 0 : i32
    %c0_i32_1 = arith.constant 0 : i32
    return %c0_i32, %c0_i32_0 : i32, i32
  }
  func.func @transform_3(%arg0: i32) -> (i32, i32) {
    %c0_i32 = arith.constant 0 : i32
    %c0_i32_0 = arith.constant 0 : i32
    %c0_i32_1 = arith.constant 0 : i32
    return %c0_i32, %c0_i32_0 : i32, i32
  }
  func.func @transform_4(%arg0: i32) -> (i32, i32) {
    %c0_i32 = arith.constant 0 : i32
    %c0_i32_0 = arith.constant 0 : i32
    %c0_i32_1 = arith.constant 0 : i32
    return %c0_i32, %c0_i32_0 : i32, i32
  }
  func.func @transform_5(%arg0: i32) -> (i32, i32, i32) {
    %c0_i32 = arith.constant 0 : i32
    %c0_i32_0 = arith.constant 0 : i32
    %c0_i32_1 = arith.constant 0 : i32
    return %arg0, %c0_i32, %c0_i32_0 : i32, i32, i32
  }
  func.func @transform_6(%arg0: i32) -> (i32, i32, i32) {
    %c0_i32 = arith.constant 0 : i32
    %c0_i32_0 = arith.constant 0 : i32
    %c0_i32_1 = arith.constant 0 : i32
    return %arg0, %c0_i32, %c0_i32_0 : i32, i32, i32
  }
}

</mosaic_0001>

<llo_original>
// kernel: tpu_custom_call.1
$region0: #{tpu_custom_call.1}
  #allocation0 [shape = 'u32[]', space=smem, size = 0x4, offset = 0x4, fixed_abs, tag = 'smem constant byte address 0x4 - core index']
  #allocation1 [shape = 'u32[72,128]{1,0:T(1,128)}', space=vmem, size = 0x9000, scoped, tag = 'internal scratch']
  #allocation2 [shape = 'f32[8,32]{1,0:T(8,128)}', space=vmem, size = 0x1000, scoped, tag = 'scratch operand']
  #allocation3 [shape = 'f32[8,32]{1,0:T(8,128)}', space=vmem, size = 0x1000, scoped, tag = 'scratch operand']
  #allocation4 [shape = 'f32[8,32]{1,0:T(8,128)}', space=vmem, size = 0x1000, scoped, tag = 'scratch operand']
  %s0 = inlined_call_operand.hbm [shape: f32[8,8,96], index: 0, kind: input, shape index: {}]
  %s1 = inlined_call_operand.hbm [shape: f32[8,8,128], index: 1, kind: input, shape index: {}]
  %s2 = inlined_call_operand.hbm [shape: f32[32,96], index: 2, kind: input, shape index: {}]
  %s3 = inlined_call_operand.hbm [shape: f32[32,128], index: 3, kind: input, shape index: {}]
  %s4 = inlined_call_operand.vmem [shape: f32[1,32], index: 4, kind: input, shape index: {}]
  %s5 = inlined_call_operand.hbm [shape: f32[1,8,256], index: 5, kind: output, shape index: {0}]
  %s6 = inlined_call_operand.hbm [shape: f32[1,8,256], index: 6, kind: output, shape index: {1}]
  %7 = xla_tuple %s5, %s6
  %s8 = sld [smem:[#allocation0]]
  $region58: #{tpu_custom_call.1} parent=0
    _
  %s10 = ssub.s32 1, %s8
  %s11 = scalar_select 0, %s10, %s8
  $region1: #{tpu_custom_call.1} parent=0
    #allocation5 [shape = 'u8[32768]{0}', space=vmem, size = 0x8000, scoped, tag = 'input window, operand 0, single buffered']
    #allocation6 [shape = 's32[1]{0}', space=sflag, size = 0x4, scoped, tag = 'scoped memory for tpu_custom_call.1']
    #allocation7 [shape = 's32[1]{0}', space=sflag, size = 0x4, scoped, tag = 'scoped memory for tpu_custom_call.1']
    #allocation8 [shape = 'u8[32768]{0}', space=vmem, size = 0x8000, scoped, tag = 'input window, operand 1, single buffered']
    #allocation9 [shape = 's32[1]{0}', space=sflag, size = 0x4, scoped, tag = 'scoped memory for tpu_custom_call.1']
    #allocation10 [shape = 'u8[16384]{0}', space=vmem, size = 0x4000, scoped, tag = 'input window, operand 2, single buffered']
    #allocation11 [shape = 'u8[16384]{0}', space=vmem, size = 0x4000, scoped, tag = 'input window, operand 3, single buffered']
    #allocation12 [shape = 's32[1]{0}', space=sflag, size = 0x4, scoped, tag = 'scoped memory for tpu_custom_call.1']
    #allocation13 [shape = 'u8[8192]{0}', space=vmem, size = 0x2000, scoped, tag = 'output window, operand 0, single buffered']
    #allocation14 [shape = 'u8[8192]{0}', space=vmem, size = 0x2000, scoped, tag = 'output window, operand 1, single buffered']
    #allocation15 [shape = 's32[1]{0}', space=sflag, size = 0x4, scoped, tag = 'scoped memory for tpu_custom_call.1']
    %12 = vsyncpa [#allocation6], 0
    %13 = vsyncpa [#allocation9], 0
    %14 = vsyncpa [#allocation12], 0
    %15 = vsyncpa [#allocation7], 0
    %16 = vsyncpa [#allocation15], 0
    // Predicated region
    $region2: #{tpu_custom_call.1} parent=1 // pred_check
      _
    $region3: #{tpu_custom_call.1} parent=1 // pred_check_branch
      %18 = sbr.rel (0) target = $region5
    $region4: #{tpu_custom_call.1} parent=1 // pred_region
      %20 = vsyncadd [#allocation6], 0
      %s21 = sshll.u32 %s0, 4
      %s22 = int_to_ptr.hbm [resolvable:$true] %s21
      %s23 = sshll.u32 [#allocation5], 4
      %s24 = int_to_ptr.vmem [resolvable:$true] %s23
      %29 = dma.hbm_to_vmem [thread:$0]  %s22, 1024, %s24, [#allocation6], 128, 128, 8
    $region5: #{tpu_custom_call.1} parent=1 // pred_fallthru
      _
    // Predicated region
    $region6: #{tpu_custom_call.1} parent=1 // pred_check
      _
    $region7: #{tpu_custom_call.1} parent=1 // pred_check_branch
      %31 = sbr.rel (0) target = $region9
    $region8: #{tpu_custom_call.1} parent=1 // pred_region
      %33 = vsyncadd [#allocation9], 0
      %s34 = sshll.u32 %s1, 4
      %s35 = int_to_ptr.hbm [resolvable:$true] %s34
      %s36 = sshll.u32 [#allocation8], 4
      %s37 = int_to_ptr.vmem [resolvable:$true] %s36
      %42 = dma.hbm_to_vmem [thread:$0]  %s35, 1024, %s37, [#allocation9], 128, 128, 8
    $region9: #{tpu_custom_call.1} parent=1 // pred_fallthru
      _
    // Predicated region
    $region10: #{tpu_custom_call.1} parent=1 // pred_check
      _
    $region11: #{tpu_custom_call.1} parent=1 // pred_check_branch
      %44 = sbr.rel (0) target = $region13
    $region12: #{tpu_custom_call.1} parent=1 // pred_region
      %46 = vsyncadd [#allocation9], 0
      %s47 = sshll.u32 %s2, 4
      %s48 = int_to_ptr.hbm [resolvable:$true] %s47
      %s49 = sshll.u32 [#allocation10], 4
      %s50 = int_to_ptr.vmem [resolvable:$true] %s49
      %55 = dma.hbm_to_vmem [thread:$0]  %s48, 512, %s50, [#allocation9], 128, 128, 8
    $region13: #{tpu_custom_call.1} parent=1 // pred_fallthru
      _
    // Predicated region
    $region14: #{tpu_custom_call.1} parent=1 // pred_check
      _
    $region15: #{tpu_custom_call.1} parent=1 // pred_check_branch
      %57 = sbr.rel (0) target = $region17
    $region16: #{tpu_custom_call.1} parent=1 // pred_region
      %59 = vsyncadd [#allocation12], 0
      %s60 = sshll.u32 %s3, 4
      %s61 = int_to_ptr.hbm [resolvable:$true] %s60
      %s62 = sshll.u32 [#allocation11], 4
      %s63 = int_to_ptr.vmem [resolvable:$true] %s62
      %68 = dma.hbm_to_vmem [thread:$0]  %s61, 512, %s63, [#allocation12], 128, 128, 8
    $region17: #{tpu_custom_call.1} parent=1 // pred_fallthru
      _
    // Predicated region
    $region18: #{tpu_custom_call.1} parent=1 // pred_check
      _
    $region19: #{tpu_custom_call.1} parent=1 // pred_check_branch
      %70 = sbr.rel (0) target = $region21
    $region20: #{tpu_custom_call.1} parent=1 // pred_region
      _
    $region21: #{tpu_custom_call.1} parent=1 // pred_fallthru
      _
    // Predicated region
    $region22: #{tpu_custom_call.1} parent=1 // pred_check
      _
    $region23: #{tpu_custom_call.1} parent=1 // pred_check_branch
      %72 = sbr.rel (0) target = $region25
    $region24: #{tpu_custom_call.1} parent=1 // pred_region
      %74 = dma.done [#allocation6], 1024
    $region25: #{tpu_custom_call.1} parent=1 // pred_fallthru
      _
    // Predicated region
    $region26: #{tpu_custom_call.1} parent=1 // pred_check
      _
    $region27: #{tpu_custom_call.1} parent=1 // pred_check_branch
      %76 = sbr.rel (0) target = $region29
    $region28: #{tpu_custom_call.1} parent=1 // pred_region
      %78 = dma.done [#allocation9], 1024
    $region29: #{tpu_custom_call.1} parent=1 // pred_fallthru
      _
    // Predicated region
    $region30: #{tpu_custom_call.1} parent=1 // pred_check
      _
    $region31: #{tpu_custom_call.1} parent=1 // pred_check_branch
      %80 = sbr.rel (0) target = $region33
    $region32: #{tpu_custom_call.1} parent=1 // pred_region
      %82 = dma.done [#allocation9], 512
    $region33: #{tpu_custom_call.1} parent=1 // pred_fallthru
      _
    // Predicated region
    $region34: #{tpu_custom_call.1} parent=1 // pred_check
      _
    $region35: #{tpu_custom_call.1} parent=1 // pred_check_branch
      %84 = sbr.rel (0) target = $region37
    $region36: #{tpu_custom_call.1} parent=1 // pred_region
      %86 = dma.done [#allocation12], 512
    $region37: #{tpu_custom_call.1} parent=1 // pred_fallthru
      _
    %p87 = scmp.eq.s32.totalorder 0, 0
    // Predicated region
    $region38: #{tpu_custom_call.1} parent=1 // pred_check
      %p88 = pneg %p87
    $region39: #{tpu_custom_call.1} parent=1 // pred_check_branch
      %90 = sbr.rel (%p88) target = $region41
    $region40: #{tpu_custom_call.1} parent=1 // pred_region
      %vm91 = vcmask 261120
      %92 = vst.msk [vmem:[#allocation2] sm:$0xff] %vm91, 0.0
      %93 = vst.msk [vmem:[#allocation3] sm:$0xff] %vm91, 0.0
      %94 = vst.msk [vmem:[#allocation4] sm:$0xff] %vm91, 0.0
    $region41: #{tpu_custom_call.1} parent=1 // pred_fallthru
      _
    %v95 = vld [vmem:[#allocation10] sm:$0xff]
    %v96 = vld [vmem:[#allocation10 + $0x8] sm:$0xff]
    %v97 = vld [vmem:[#allocation10 + $0x10] sm:$0xff]
    %v98 = vld [vmem:[#allocation10 + $0x18] sm:$0xff]
    %v99 = vld [vmem:[#allocation11] sm:$0xff]
    %v100 = vld [vmem:[#allocation11 + $0x8] sm:$0xff]
    %v101 = vld [vmem:[#allocation11 + $0x10] sm:$0xff]
    %v102 = vld [vmem:[#allocation11 + $0x18] sm:$0xff]
    %v103 = vld [vmem:[%s4] sm:$0x1]
    %v105 = vperm.slane %v103, 0
    %v106 = vld [vmem:[#allocation2] sm:$0xff]
    %v107 = vld [vmem:[#allocation3] sm:$0xff]
    %v108 = vld [vmem:[#allocation4] sm:$0xff]
    %v109 = vld [vmem:[#allocation5] sm:$0xff]
    %v110 = vld [vmem:[#allocation8] sm:$0xff]
    %vm111 = vcmask 261120
    %v113 = vsel %vm111, %v106, 0
    %115 = vmatpush.msra.mxu0 0.0
    %116 = vmatpush.msra.mxu0 0.0
    %117 = vmatpush.msra.mxu0 0.0
    %118 = vmatpush.msra.mxu0 0.0
    %119 = vmatpush.msra.mxu0 0.0
    %120 = vmatpush.msra.mxu0 0.0
    %121 = vmatpush.msra.mxu0 0.0
    %122 = vmatpush.msra.mxu0 0.0
    %123 = vmatpush.msra.mxu0 0.0
    %124 = vmatpush.msra.mxu0 0.0
    %125 = vmatpush.msra.mxu0 0.0
    %126 = vmatpush.msra.mxu0 0.0
    %127 = vmatpush.msra.mxu0 %v98
    %128 = vmatpush.msra.mxu0 %v97
    %129 = vmatpush.msra.mxu0 %v96
    %130 = vmatpush.msra.mxu0 %v95
    %131 = vmatmul.f32.gmra.mxu0 %v113
    %v132 = vpop.f32.mrf.mxu0
    %v133 = vadd.f32 0.0, %v132
    %134 = vdwg.mxu0
    %v136 = vsel %vm111, %v107, 0
    %138 = vmatpush.msra.mxu0 0.0
    %139 = vmatpush.msra.mxu0 0.0
    %140 = vmatpush.msra.mxu0 0.0
    %141 = vmatpush.msra.mxu0 0.0
    %142 = vmatpush.msra.mxu0 0.0
    %143 = vmatpush.msra.mxu0 0.0
    %144 = vmatpush.msra.mxu0 0.0
    %145 = vmatpush.msra.mxu0 0.0
    %146 = vmatpush.msra.mxu0 0.0
    %147 = vmatpush.msra.mxu0 0.0
    %148 = vmatpush.msra.mxu0 0.0
    %149 = vmatpush.msra.mxu0 0.0
    %150 = vmatpush.msra.mxu0 %v102
    %151 = vmatpush.msra.mxu0 %v101
    %152 = vmatpush.msra.mxu0 %v100
    %153 = vmatpush.msra.mxu0 %v99
    %154 = vmatmul.f32.gmra.mxu0 %v136
    %v155 = vpop.f32.mrf.mxu0
    %v156 = vadd.f32 0.0, %v155
    %157 = vdwg.mxu0
    %v158 = vadd.f32 %v109, %v133
    %v159 = vxor.u32 %v158, 2147483648
    %v160 = vmul.f32 %v159, 1.442695
    %v161 = vpow.pop %v160
    %v162 = vadd.f32 %v161, 1.0
    %v163 = vrcp.pop %v162
    %v164 = vmul.f32 %v162, %v163
    %v165 = vsub.f32 1.0, %v164
    %v166 = vmul.f32 %v163, %v165
    %v167 = vadd.f32 %v163, %v166
    %vm168 = vweird.f32 %v162
    %vm169 = vweird.f32 %v163
    %vm170 = vmor %vm168, %vm169
    %v171 = vsel %vm170, %v163, %v167
    %v172 = vand.u32 2147483647, %v162
    %vm173 = vcmp.eq.f32.partialorder %v172, 8.507059e+37
    %v174 = vand.u32 %v162, 2147483648
    %v175 = vor.u32 1.1754944e-38, %v174
    %v176 = vsel %vm173, %v175, %v171
    %v177 = vmul.f32 1.0, %v176
    %178 = vrot.lane.b32.xlu0 %v105, 64
    %v179 = vpop.permute.xlu0 %178
    %v181 = vadd.f32 %v133, %v179
    %183 = vrot.lane.b32.xlu0 %v181, 64
    %v184 = vpop.permute.xlu0 %183
    %v186 = vmul.f32 %v177, %v184
    %188 = vrot.lane.b32.xlu0 %v186, 64
    %v189 = vpop.permute.xlu0 %188
    %v191 = vadd.f32 %v109, %v189
    %v192 = vtanh.pop %v191
    %v193 = vsub.f32 1.0, %v177
    %195 = vrot.lane.b32.xlu0 %v192, 96
    %v196 = vpop.permute.xlu0 %195
    %v198 = vmul.f32 %v193, %v196
    %199 = vrot.lane.b32.xlu0 %v106, 32
    %v200 = vpop.permute.xlu0 %199
    %v202 = vmul.f32 %v177, %v200
    %v203 = vadd.f32 %v198, %v202
    %v204 = vadd.f32 %v110, %v156
    %v205 = vxor.u32 %v204, 2147483648
    %v206 = vmul.f32 %v205, 1.442695
    %v207 = vpow.pop %v206
    %v208 = vadd.f32 %v207, 1.0
    %v209 = vrcp.pop %v208
    %v210 = vmul.f32 %v208, %v209
    %v211 = vsub.f32 1.0, %v210
    %v212 = vmul.f32 %v209, %v211
    %v213 = vadd.f32 %v209, %v212
    %vm214 = vweird.f32 %v208
    %vm215 = vweird.f32 %v209
    %vm216 = vmor %vm214, %vm215
    %v217 = vsel %vm216, %v209, %v213
    %v218 = vand.u32 2147483647, %v208
    %vm219 = vcmp.eq.f32.partialorder %v218, 8.507059e+37
    %v220 = vand.u32 %v208, 2147483648
    %v221 = vor.u32 1.1754944e-38, %v220
    %v222 = vsel %vm219, %v221, %v217
    %v223 = vmul.f32 1.0, %v222
    %v224 = vtanh.pop %v204
    %226 = vrot.lane.b32.xlu0 %v108, 32
    %v227 = vpop.permute.xlu0 %226
    %v229 = vmul.f32 %v223, %v227
    %231 = vrot.lane.b32.xlu0 %v224, 32
    %v232 = vpop.permute.xlu0 %231
    %v234 = vmul.f32 %v223, %v232
    %236 = vrot.lane.b32.xlu0 %v234, 32
    %v237 = vpop.permute.xlu0 %236
    %v239 = vadd.f32 %v229, %v237
    %v240 = vtanh.pop %v239
    %242 = vrot.lane.b32.xlu0 %v240, 32
    %v243 = vpop.permute.xlu0 %242
    %v245 = vmul.f32 %v223, %v243
    %s246 = scalar_lea.vmem [#allocation5], 8
    %v247 = vld [vmem:[%s246] sm:$0xff]
    %s248 = scalar_lea.vmem [#allocation8], 8
    %v249 = vld [vmem:[%s248] sm:$0xff]
    %251 = vrot.lane.b32.xlu0 %v203, 96
    %v252 = vpop.permute.xlu0 %251
    %v253 = vsel %vm111, %v252, 0
    %255 = vmatpush.msra.mxu0 0.0
    %256 = vmatpush.msra.mxu0 0.0
    %257 = vmatpush.msra.mxu0 0.0
    %258 = vmatpush.msra.mxu0 0.0
    %259 = vmatpush.msra.mxu0 0.0
    %260 = vmatpush.msra.mxu0 0.0
    %261 = vmatpush.msra.mxu0 0.0
    %262 = vmatpush.msra.mxu0 0.0
    %263 = vmatpush.msra.mxu0 0.0
    %264 = vmatpush.msra.mxu0 0.0
    %265 = vmatpush.msra.mxu0 0.0
    %266 = vmatpush.msra.mxu0 0.0
    %267 = vmatpush.msra.mxu0 %v98
    %268 = vmatpush.msra.mxu0 %v97
    %269 = vmatpush.msra.mxu0 %v96
    %270 = vmatpush.msra.mxu0 %v95
    %271 = vmatmul.f32.gmra.mxu0 %v253
    %v272 = vpop.f32.mrf.mxu0
    %v273 = vadd.f32 0.0, %v272
    %274 = vdwg.mxu0
    %276 = vrot.lane.b32.xlu0 %v245, 64
    %v277 = vpop.permute.xlu0 %276
    %v278 = vsel %vm111, %v277, 0
    %280 = vmatpush.msra.mxu0 0.0
    %281 = vmatpush.msra.mxu0 0.0
    %282 = vmatpush.msra.mxu0 0.0
    %283 = vmatpush.msra.mxu0 0.0
    %284 = vmatpush.msra.mxu0 0.0
    %285 = vmatpush.msra.mxu0 0.0
    %286 = vmatpush.msra.mxu0 0.0
    %287 = vmatpush.msra.mxu0 0.0
    %288 = vmatpush.msra.mxu0 0.0
    %289 = vmatpush.msra.mxu0 0.0
    %290 = vmatpush.msra.mxu0 0.0
    %291 = vmatpush.msra.mxu0 0.0
    %292 = vmatpush.msra.mxu0 %v102
    %293 = vmatpush.msra.mxu0 %v101
    %294 = vmatpush.msra.mxu0 %v100
    %295 = vmatpush.msra.mxu0 %v99
    %296 = vmatmul.f32.gmra.mxu0 %v278
    %v297 = vpop.f32.mrf.mxu0
    %v298 = vadd.f32 0.0, %v297
    %299 = vdwg.mxu0
    %v300 = vadd.f32 %v247, %v273
    %v301 = vxor.u32 %v300, 2147483648
    %v302 = vmul.f32 %v301, 1.442695
    %v303 = vpow.pop %v302
    %v304 = vadd.f32 %v303, 1.0
    %v305 = vrcp.pop %v304
    %v306 = vmul.f32 %v304, %v305
    %v307 = vsub.f32 1.0, %v306
    %v308 = vmul.f32 %v305, %v307
    %v309 = vadd.f32 %v305, %v308
    %vm310 = vweird.f32 %v304
    %vm311 = vweird.f32 %v305
    %vm312 = vmor %vm310, %vm311
    %v313 = vsel %vm312, %v305, %v309
    %v314 = vand.u32 2147483647, %v304
    %vm315 = vcmp.eq.f32.partialorder %v314, 8.507059e+37
    %v316 = vand.u32 %v304, 2147483648
    %v317 = vor.u32 1.1754944e-38, %v316
    %v318 = vsel %vm315, %v317, %v313
    %v319 = vmul.f32 1.0, %v318
    %v320 = vadd.f32 %v273, %v179
    %322 = vrot.lane.b32.xlu0 %v320, 64
    %v323 = vpop.permute.xlu0 %322
    %v325 = vmul.f32 %v319, %v323
    %327 = vrot.lane.b32.xlu0 %v325, 64
    %v328 = vpop.permute.xlu0 %327
    %v330 = vadd.f32 %v247, %v328
    %v331 = vtanh.pop %v330
    %v332 = vsub.f32 1.0, %v319
    %334 = vrot.lane.b32.xlu0 %v331, 96
    %v335 = vpop.permute.xlu0 %334
    %v337 = vmul.f32 %v332, %v335
    %v338 = vmul.f32 %v319, %v203
    %v339 = vadd.f32 %v337, %v338
    %v340 = vadd.f32 %v249, %v298
    %v341 = vxor.u32 %v340, 2147483648
    %v342 = vmul.f32 %v341, 1.442695
    %v343 = vpow.pop %v342
    %v344 = vadd.f32 %v343, 1.0
    %v345 = vrcp.pop %v344
    %v346 = vmul.f32 %v344, %v345
    %v347 = vsub.f32 1.0, %v346
    %v348 = vmul.f32 %v345, %v347
    %v349 = vadd.f32 %v345, %v348
    %vm350 = vweird.f32 %v344
    %vm351 = vweird.f32 %v345
    %vm352 = vmor %vm350, %vm351
    %v353 = vsel %vm352, %v345, %v349
    %v354 = vand.u32 2147483647, %v344
    %vm355 = vcmp.eq.f32.partialorder %v354, 8.507059e+37
    %v356 = vand.u32 %v344, 2147483648
    %v357 = vor.u32 1.1754944e-38, %v356
    %v358 = vsel %vm355, %v357, %v353
    %v359 = vmul.f32 1.0, %v358
    %v360 = vtanh.pop %v340
    %v361 = vmul.f32 %v359, %v239
    %363 = vrot.lane.b32.xlu0 %v360, 32
    %v364 = vpop.permute.xlu0 %363
    %v366 = vmul.f32 %v359, %v364
    %368 = vrot.lane.b32.xlu0 %v366, 32
    %v369 = vpop.permute.xlu0 %368
    %v371 = vadd.f32 %v361, %v369
    %v372 = vtanh.pop %v371
    %374 = vrot.lane.b32.xlu0 %v372, 32
    %v375 = vpop.permute.xlu0 %374
    %v377 = vmul.f32 %v359, %v375
    %s378 = scalar_lea.vmem [#allocation5], 16
    %v379 = vld [vmem:[%s378] sm:$0xff]
    %s380 = scalar_lea.vmem [#allocation8], 16
    %v381 = vld [vmem:[%s380] sm:$0xff]
    %383 = vrot.lane.b32.xlu0 %v339, 96
    %v384 = vpop.permute.xlu0 %383
    %v385 = vsel %vm111, %v384, 0
    %387 = vmatpush.msra.mxu0 0.0
    %388 = vmatpush.msra.mxu0 0.0
    %389 = vmatpush.msra.mxu0 0.0
    %390 = vmatpush.msra.mxu0 0.0
    %391 = vmatpush.msra.mxu0 0.0
    %392 = vmatpush.msra.mxu0 0.0
    %393 = vmatpush.msra.mxu0 0.0
    %394 = vmatpush.msra.mxu0 0.0
    %395 = vmatpush.msra.mxu0 0.0
    %396 = vmatpush.msra.mxu0 0.0
    %397 = vmatpush.msra.mxu0 0.0
    %398 = vmatpush.msra.mxu0 0.0
    %399 = vmatpush.msra.mxu0 %v98
    %400 = vmatpush.msra.mxu0 %v97
    %401 = vmatpush.msra.mxu0 %v96
    %402 = vmatpush.msra.mxu0 %v95
    %403 = vmatmul.f32.gmra.mxu0 %v385
    %v404 = vpop.f32.mrf.mxu0
    %v405 = vadd.f32 0.0, %v404
    %406 = vdwg.mxu0
    %408 = vrot.lane.b32.xlu0 %v377, 64
    %v409 = vpop.permute.xlu0 %408
    %v410 = vsel %vm111, %v409, 0
    %412 = vmatpush.msra.mxu0 0.0
    %413 = vmatpush.msra.mxu0 0.0
    %414 = vmatpush.msra.mxu0 0.0
    %415 = vmatpush.msra.mxu0 0.0
    %416 = vmatpush.msra.mxu0 0.0
    %417 = vmatpush.msra.mxu0 0.0
    %418 = vmatpush.msra.mxu0 0.0
    %419 = vmatpush.msra.mxu0 0.0
    %420 = vmatpush.msra.mxu0 0.0
    %421 = vmatpush.msra.mxu0 0.0
    %422 = vmatpush.msra.mxu0 0.0
    %423 = vmatpush.msra.mxu0 0.0
    %424 = vmatpush.msra.mxu0 %v102
    %425 = vmatpush.msra.mxu0 %v101
    %426 = vmatpush.msra.mxu0 %v100
    %427 = vmatpush.msra.mxu0 %v99
    %428 = vmatmul.f32.gmra.mxu0 %v410
    %v429 = vpop.f32.mrf.mxu0
    %v430 = vadd.f32 0.0, %v429
    %431 = vdwg.mxu0
    %v432 = vadd.f32 %v379, %v405
    %v433 = vxor.u32 %v432, 2147483648
    %v434 = vmul.f32 %v433, 1.442695
    %v435 = vpow.pop %v434
    %v436 = vadd.f32 %v435, 1.0
    %v437 = vrcp.pop %v436
    %v438 = vmul.f32 %v436, %v437
    %v439 = vsub.f32 1.0, %v438
    %v440 = vmul.f32 %v437, %v439
    %v441 = vadd.f32 %v437, %v440
    %vm442 = vweird.f32 %v436
    %vm443 = vweird.f32 %v437
    %vm444 = vmor %vm442, %vm443
    %v445 = vsel %vm444, %v437, %v441
    %v446 = vand.u32 2147483647, %v436
    %vm447 = vcmp.eq.f32.partialorder %v446, 8.507059e+37
    %v448 = vand.u32 %v436, 2147483648
    %v449 = vor.u32 1.1754944e-38, %v448
    %v450 = vsel %vm447, %v449, %v445
    %v451 = vmul.f32 1.0, %v450
    %v452 = vadd.f32 %v405, %v179
    %454 = vrot.lane.b32.xlu0 %v452, 64
    %v455 = vpop.permute.xlu0 %454
    %v457 = vmul.f32 %v451, %v455
    %459 = vrot.lane.b32.xlu0 %v457, 64
    %v460 = vpop.permute.xlu0 %459
    %v462 = vadd.f32 %v379, %v460
    %v463 = vtanh.pop %v462
    %v464 = vsub.f32 1.0, %v451
    %466 = vrot.lane.b32.xlu0 %v463, 96
    %v467 = vpop.permute.xlu0 %466
    %v469 = vmul.f32 %v464, %v467
    %v470 = vmul.f32 %v451, %v339
    %v471 = vadd.f32 %v469, %v470
    %v472 = vadd.f32 %v381, %v430
    %v473 = vxor.u32 %v472, 2147483648
    %v474 = vmul.f32 %v473, 1.442695
    %v475 = vpow.pop %v474
    %v476 = vadd.f32 %v475, 1.0
    %v477 = vrcp.pop %v476
    %v478 = vmul.f32 %v476, %v477
    %v479 = vsub.f32 1.0, %v478
    %v480 = vmul.f32 %v477, %v479
    %v481 = vadd.f32 %v477, %v480
    %vm482 = vweird.f32 %v476
    %vm483 = vweird.f32 %v477
    %vm484 = vmor %vm482, %vm483
    %v485 = vsel %vm484, %v477, %v481
    %v486 = vand.u32 2147483647, %v476
    %vm487 = vcmp.eq.f32.partialorder %v486, 8.507059e+37
    %v488 = vand.u32 %v476, 2147483648
    %v489 = vor.u32 1.1754944e-38, %v488
    %v490 = vsel %vm487, %v489, %v485
    %v491 = vmul.f32 1.0, %v490
    %v492 = vtanh.pop %v472
    %v493 = vmul.f32 %v491, %v371
    %495 = vrot.lane.b32.xlu0 %v492, 32
    %v496 = vpop.permute.xlu0 %495
    %v498 = vmul.f32 %v491, %v496
    %500 = vrot.lane.b32.xlu0 %v498, 32
    %v501 = vpop.permute.xlu0 %500
    %v503 = vadd.f32 %v493, %v501
    %v504 = vtanh.pop %v503
    %506 = vrot.lane.b32.xlu0 %v504, 32
    %v507 = vpop.permute.xlu0 %506
    %v509 = vmul.f32 %v491, %v507
    %s510 = scalar_lea.vmem [#allocation5], 24
    %v511 = vld [vmem:[%s510] sm:$0xff]
    %s512 = scalar_lea.vmem [#allocation8], 24
    %v513 = vld [vmem:[%s512] sm:$0xff]
    %515 = vrot.lane.b32.xlu0 %v471, 96
    %v516 = vpop.permute.xlu0 %515
    %v517 = vsel %vm111, %v516, 0
    %519 = vmatpush.msra.mxu0 0.0
    %520 = vmatpush.msra.mxu0 0.0
    %521 = vmatpush.msra.mxu0 0.0
    %522 = vmatpush.msra.mxu0 0.0
    %523 = vmatpush.msra.mxu0 0.0
    %524 = vmatpush.msra.mxu0 0.0
    %525 = vmatpush.msra.mxu0 0.0
    %526 = vmatpush.msra.mxu0 0.0
    %527 = vmatpush.msra.mxu0 0.0
    %528 = vmatpush.msra.mxu0 0.0
    %529 = vmatpush.msra.mxu0 0.0
    %530 = vmatpush.msra.mxu0 0.0
    %531 = vmatpush.msra.mxu0 %v98
    %532 = vmatpush.msra.mxu0 %v97
    %533 = vmatpush.msra.mxu0 %v96
    %534 = vmatpush.msra.mxu0 %v95
    %535 = vmatmul.f32.gmra.mxu0 %v517
    %v536 = vpop.f32.mrf.mxu0
    %v537 = vadd.f32 0.0, %v536
    %538 = vdwg.mxu0
    %540 = vrot.lane.b32.xlu0 %v509, 64
    %v541 = vpop.permute.xlu0 %540
    %v542 = vsel %vm111, %v541, 0
    %544 = vmatpush.msra.mxu0 0.0
    %545 = vmatpush.msra.mxu0 0.0
    %546 = vmatpush.msra.mxu0 0.0
    %547 = vmatpush.msra.mxu0 0.0
    %548 = vmatpush.msra.mxu0 0.0
    %549 = vmatpush.msra.mxu0 0.0
    %550 = vmatpush.msra.mxu0 0.0
    %551 = vmatpush.msra.mxu0 0.0
    %552 = vmatpush.msra.mxu0 0.0
    %553 = vmatpush.msra.mxu0 0.0
    %554 = vmatpush.msra.mxu0 0.0
    %555 = vmatpush.msra.mxu0 0.0
    %556 = vmatpush.msra.mxu0 %v102
    %557 = vmatpush.msra.mxu0 %v101
    %558 = vmatpush.msra.mxu0 %v100
    %559 = vmatpush.msra.mxu0 %v99
    %560 = vmatmul.f32.gmra.mxu0 %v542
    %v561 = vpop.f32.mrf.mxu0
    %v562 = vadd.f32 0.0, %v561
    %563 = vdwg.mxu0
    %v564 = vadd.f32 %v511, %v537
    %v565 = vxor.u32 %v564, 2147483648
    %v566 = vmul.f32 %v565, 1.442695
    %v567 = vpow.pop %v566
    %v568 = vadd.f32 %v567, 1.0
    %v569 = vrcp.pop %v568
    %v570 = vmul.f32 %v568, %v569
    %v571 = vsub.f32 1.0, %v570
    %v572 = vmul.f32 %v569, %v571
    %v573 = vadd.f32 %v569, %v572
    %vm574 = vweird.f32 %v568
    %vm575 = vweird.f32 %v569
    %vm576 = vmor %vm574, %vm575
    %v577 = vsel %vm576, %v569, %v573
    %v578 = vand.u32 2147483647, %v568
    %vm579 = vcmp.eq.f32.partialorder %v578, 8.507059e+37
    %v580 = vand.u32 %v568, 2147483648
    %v581 = vor.u32 1.1754944e-38, %v580
    %v582 = vsel %vm579, %v581, %v577
    %v583 = vmul.f32 1.0, %v582
    %v584 = vadd.f32 %v537, %v179
    %586 = vrot.lane.b32.xlu0 %v584, 64
    %v587 = vpop.permute.xlu0 %586
    %v589 = vmul.f32 %v583, %v587
    %591 = vrot.lane.b32.xlu0 %v589, 64
    %v592 = vpop.permute.xlu0 %591
    %v594 = vadd.f32 %v511, %v592
    %v595 = vtanh.pop %v594
    %v596 = vsub.f32 1.0, %v583
    %598 = vrot.lane.b32.xlu0 %v595, 96
    %v599 = vpop.permute.xlu0 %598
    %v601 = vmul.f32 %v596, %v599
    %v602 = vmul.f32 %v583, %v471
    %v603 = vadd.f32 %v601, %v602
    %v604 = vadd.f32 %v513, %v562
    %v605 = vxor.u32 %v604, 2147483648
    %v606 = vmul.f32 %v605, 1.442695
    %v607 = vpow.pop %v606
    %v608 = vadd.f32 %v607, 1.0
    %v609 = vrcp.pop %v608
    %v610 = vmul.f32 %v608, %v609
    %v611 = vsub.f32 1.0, %v610
    %v612 = vmul.f32 %v609, %v611
    %v613 = vadd.f32 %v609, %v612
    %vm614 = vweird.f32 %v608
    %vm615 = vweird.f32 %v609
    %vm616 = vmor %vm614, %vm615
    %v617 = vsel %vm616, %v609, %v613
    %v618 = vand.u32 2147483647, %v608
    %vm619 = vcmp.eq.f32.partialorder %v618, 8.507059e+37
    %v620 = vand.u32 %v608, 2147483648
    %v621 = vor.u32 1.1754944e-38, %v620
    %v622 = vsel %vm619, %v621, %v617
    %v623 = vmul.f32 1.0, %v622
    %v624 = vtanh.pop %v604
    %v625 = vmul.f32 %v623, %v503
    %627 = vrot.lane.b32.xlu0 %v624, 32
    %v628 = vpop.permute.xlu0 %627
    %v630 = vmul.f32 %v623, %v628
    %632 = vrot.lane.b32.xlu0 %v630, 32
    %v633 = vpop.permute.xlu0 %632
    %v635 = vadd.f32 %v625, %v633
    %v636 = vtanh.pop %v635
    %638 = vrot.lane.b32.xlu0 %v636, 32
    %v639 = vpop.permute.xlu0 %638
    %v641 = vmul.f32 %v623, %v639
    %s642 = scalar_lea.vmem [#allocation5], 32
    %v643 = vld [vmem:[%s642] sm:$0xff]
    %s644 = scalar_lea.vmem [#allocation8], 32
    %v645 = vld [vmem:[%s644] sm:$0xff]
    %647 = vrot.lane.b32.xlu0 %v603, 96
    %v648 = vpop.permute.xlu0 %647
    %v649 = vsel %vm111, %v648, 0
    %651 = vmatpush.msra.mxu0 0.0
    %652 = vmatpush.msra.mxu0 0.0
    %653 = vmatpush.msra.mxu0 0.0
    %654 = vmatpush.msra.mxu0 0.0
    %655 = vmatpush.msra.mxu0 0.0
    %656 = vmatpush.msra.mxu0 0.0
    %657 = vmatpush.msra.mxu0 0.0
    %658 = vmatpush.msra.mxu0 0.0
    %659 = vmatpush.msra.mxu0 0.0
    %660 = vmatpush.msra.mxu0 0.0
    %661 = vmatpush.msra.mxu0 0.0
    %662 = vmatpush.msra.mxu0 0.0
    %663 = vmatpush.msra.mxu0 %v98
    %664 = vmatpush.msra.mxu0 %v97
    %665 = vmatpush.msra.mxu0 %v96
    %666 = vmatpush.msra.mxu0 %v95
    %667 = vmatmul.f32.gmra.mxu0 %v649
    %v668 = vpop.f32.mrf.mxu0
    %v669 = vadd.f32 0.0, %v668
    %670 = vdwg.mxu0
    %672 = vrot.lane.b32.xlu0 %v641, 64
    %v673 = vpop.permute.xlu0 %672
    %v674 = vsel %vm111, %v673, 0
    %676 = vmatpush.msra.mxu0 0.0
    %677 = vmatpush.msra.mxu0 0.0
    %678 = vmatpush.msra.mxu0 0.0
    %679 = vmatpush.msra.mxu0 0.0
    %680 = vmatpush.msra.mxu0 0.0
    %681 = vmatpush.msra.mxu0 0.0
    %682 = vmatpush.msra.mxu0 0.0
    %683 = vmatpush.msra.mxu0 0.0
    %684 = vmatpush.msra.mxu0 0.0
    %685 = vmatpush.msra.mxu0 0.0
    %686 = vmatpush.msra.mxu0 0.0
    %687 = vmatpush.msra.mxu0 0.0
    %688 = vmatpush.msra.mxu0 %v102
    %689 = vmatpush.msra.mxu0 %v101
    %690 = vmatpush.msra.mxu0 %v100
    %691 = vmatpush.msra.mxu0 %v99
    %692 = vmatmul.f32.gmra.mxu0 %v674
    %v693 = vpop.f32.mrf.mxu0
    %v694 = vadd.f32 0.0, %v693
    %695 = vdwg.mxu0
    %v696 = vadd.f32 %v643, %v669
    %v697 = vxor.u32 %v696, 2147483648
    %v698 = vmul.f32 %v697, 1.442695
    %v699 = vpow.pop %v698
    %v700 = vadd.f32 %v699, 1.0
    %v701 = vrcp.pop %v700
    %v702 = vmul.f32 %v700, %v701
    %v703 = vsub.f32 1.0, %v702
    %v704 = vmul.f32 %v701, %v703
    %v705 = vadd.f32 %v701, %v704
    %vm706 = vweird.f32 %v700
    %vm707 = vweird.f32 %v701
    %vm708 = vmor %vm706, %vm707
    %v709 = vsel %vm708, %v701, %v705
    %v710 = vand.u32 2147483647, %v700
    %vm711 = vcmp.eq.f32.partialorder %v710, 8.507059e+37
    %v712 = vand.u32 %v700, 2147483648
    %v713 = vor.u32 1.1754944e-38, %v712
    %v714 = vsel %vm711, %v713, %v709
    %v715 = vmul.f32 1.0, %v714
    %v716 = vadd.f32 %v669, %v179
    %718 = vrot.lane.b32.xlu0 %v716, 64
    %v719 = vpop.permute.xlu0 %718
    %v721 = vmul.f32 %v715, %v719
    %723 = vrot.lane.b32.xlu0 %v721, 64
    %v724 = vpop.permute.xlu0 %723
    %v726 = vadd.f32 %v643, %v724
    %v727 = vtanh.pop %v726
    %v728 = vsub.f32 1.0, %v715
    %730 = vrot.lane.b32.xlu0 %v727, 96
    %v731 = vpop.permute.xlu0 %730
    %v733 = vmul.f32 %v728, %v731
    %v734 = vmul.f32 %v715, %v603
    %v735 = vadd.f32 %v733, %v734
    %v736 = vadd.f32 %v645, %v694
    %v737 = vxor.u32 %v736, 2147483648
    %v738 = vmul.f32 %v737, 1.442695
    %v739 = vpow.pop %v738
    %v740 = vadd.f32 %v739, 1.0
    %v741 = vrcp.pop %v740
    %v742 = vmul.f32 %v740, %v741
    %v743 = vsub.f32 1.0, %v742
    %v744 = vmul.f32 %v741, %v743
    %v745 = vadd.f32 %v741, %v744
    %vm746 = vweird.f32 %v740
    %vm747 = vweird.f32 %v741
    %vm748 = vmor %vm746, %vm747
    %v749 = vsel %vm748, %v741, %v745
    %v750 = vand.u32 2147483647, %v740
    %vm751 = vcmp.eq.f32.partialorder %v750, 8.507059e+37
    %v752 = vand.u32 %v740, 2147483648
    %v753 = vor.u32 1.1754944e-38, %v752
    %v754 = vsel %vm751, %v753, %v749
    %v755 = vmul.f32 1.0, %v754
    %v756 = vtanh.pop %v736
    %v757 = vmul.f32 %v755, %v635
    %759 = vrot.lane.b32.xlu0 %v756, 32
    %v760 = vpop.permute.xlu0 %759
    %v762 = vmul.f32 %v755, %v760
    %764 = vrot.lane.b32.xlu0 %v762, 32
    %v765 = vpop.permute.xlu0 %764
    %v767 = vadd.f32 %v757, %v765
    %v768 = vtanh.pop %v767
    %770 = vrot.lane.b32.xlu0 %v768, 32
    %v771 = vpop.permute.xlu0 %770
    %v773 = vmul.f32 %v755, %v771
    %s774 = scalar_lea.vmem [#allocation5], 40
    %v775 = vld [vmem:[%s774] sm:$0xff]
    %s776 = scalar_lea.vmem [#allocation8], 40
    %v777 = vld [vmem:[%s776] sm:$0xff]
    %779 = vrot.lane.b32.xlu0 %v735, 96
    %v780 = vpop.permute.xlu0 %779
    %v781 = vsel %vm111, %v780, 0
    %783 = vmatpush.msra.mxu0 0.0
    %784 = vmatpush.msra.mxu0 0.0
    %785 = vmatpush.msra.mxu0 0.0
    %786 = vmatpush.msra.mxu0 0.0
    %787 = vmatpush.msra.mxu0 0.0
    %788 = vmatpush.msra.mxu0 0.0
    %789 = vmatpush.msra.mxu0 0.0
    %790 = vmatpush.msra.mxu0 0.0
    %791 = vmatpush.msra.mxu0 0.0
    %792 = vmatpush.msra.mxu0 0.0
    %793 = vmatpush.msra.mxu0 0.0
    %794 = vmatpush.msra.mxu0 0.0
    %795 = vmatpush.msra.mxu0 %v98
    %796 = vmatpush.msra.mxu0 %v97
    %797 = vmatpush.msra.mxu0 %v96
    %798 = vmatpush.msra.mxu0 %v95
    %799 = vmatmul.f32.gmra.mxu0 %v781
    %v800 = vpop.f32.mrf.mxu0
    %v801 = vadd.f32 0.0, %v800
    %802 = vdwg.mxu0
    %804 = vrot.lane.b32.xlu0 %v773, 64
    %v805 = vpop.permute.xlu0 %804
    %v806 = vsel %vm111, %v805, 0
    %808 = vmatpush.msra.mxu0 0.0
    %809 = vmatpush.msra.mxu0 0.0
    %810 = vmatpush.msra.mxu0 0.0
    %811 = vmatpush.msra.mxu0 0.0
    %812 = vmatpush.msra.mxu0 0.0
    %813 = vmatpush.msra.mxu0 0.0
    %814 = vmatpush.msra.mxu0 0.0
    %815 = vmatpush.msra.mxu0 0.0
    %816 = vmatpush.msra.mxu0 0.0
    %817 = vmatpush.msra.mxu0 0.0
    %818 = vmatpush.msra.mxu0 0.0
    %819 = vmatpush.msra.mxu0 0.0
    %820 = vmatpush.msra.mxu0 %v102
    %821 = vmatpush.msra.mxu0 %v101
    %822 = vmatpush.msra.mxu0 %v100
    %823 = vmatpush.msra.mxu0 %v99
    %824 = vmatmul.f32.gmra.mxu0 %v806
    %v825 = vpop.f32.mrf.mxu0
    %v826 = vadd.f32 0.0, %v825
    %827 = vdwg.mxu0
    %v828 = vadd.f32 %v775, %v801
    %v829 = vxor.u32 %v828, 2147483648
    %v830 = vmul.f32 %v829, 1.442695
    %v831 = vpow.pop %v830
    %v832 = vadd.f32 %v831, 1.0
    %v833 = vrcp.pop %v832
    %v834 = vmul.f32 %v832, %v833
    %v835 = vsub.f32 1.0, %v834
    %v836 = vmul.f32 %v833, %v835
    %v837 = vadd.f32 %v833, %v836
    %vm838 = vweird.f32 %v832
    %vm839 = vweird.f32 %v833
    %vm840 = vmor %vm838, %vm839
    %v841 = vsel %vm840, %v833, %v837
    %v842 = vand.u32 2147483647, %v832
    %vm843 = vcmp.eq.f32.partialorder %v842, 8.507059e+37
    %v844 = vand.u32 %v832, 2147483648
    %v845 = vor.u32 1.1754944e-38, %v844
    %v846 = vsel %vm843, %v845, %v841
    %v847 = vmul.f32 1.0, %v846
    %v848 = vadd.f32 %v801, %v179
    %850 = vrot.lane.b32.xlu0 %v848, 64
    %v851 = vpop.permute.xlu0 %850
    %v853 = vmul.f32 %v847, %v851
    %855 = vrot.lane.b32.xlu0 %v853, 64
    %v856 = vpop.permute.xlu0 %855
    %v858 = vadd.f32 %v775, %v856
    %v859 = vtanh.pop %v858
    %v860 = vsub.f32 1.0, %v847
    %862 = vrot.lane.b32.xlu0 %v859, 96
    %v863 = vpop.permute.xlu0 %862
    %v865 = vmul.f32 %v860, %v863
    %v866 = vmul.f32 %v847, %v735
    %v867 = vadd.f32 %v865, %v866
    %v868 = vadd.f32 %v777, %v826
    %v869 = vxor.u32 %v868, 2147483648
    %v870 = vmul.f32 %v869, 1.442695
    %v871 = vpow.pop %v870
    %v872 = vadd.f32 %v871, 1.0
    %v873 = vrcp.pop %v872
    %v874 = vmul.f32 %v872, %v873
    %v875 = vsub.f32 1.0, %v874
    %v876 = vmul.f32 %v873, %v875
    %v877 = vadd.f32 %v873, %v876
    %vm878 = vweird.f32 %v872
    %vm879 = vweird.f32 %v873
    %vm880 = vmor %vm878, %vm879
    %v881 = vsel %vm880, %v873, %v877
    %v882 = vand.u32 2147483647, %v872
    %vm883 = vcmp.eq.f32.partialorder %v882, 8.507059e+37
    %v884 = vand.u32 %v872, 2147483648
    %v885 = vor.u32 1.1754944e-38, %v884
    %v886 = vsel %vm883, %v885, %v881
    %v887 = vmul.f32 1.0, %v886
    %v888 = vtanh.pop %v868
    %v889 = vmul.f32 %v887, %v767
    %891 = vrot.lane.b32.xlu0 %v888, 32
    %v892 = vpop.permute.xlu0 %891
    %v894 = vmul.f32 %v887, %v892
    %896 = vrot.lane.b32.xlu0 %v894, 32
    %v897 = vpop.permute.xlu0 %896
    %v899 = vadd.f32 %v889, %v897
    %v900 = vtanh.pop %v899
    %902 = vrot.lane.b32.xlu0 %v900, 32
    %v903 = vpop.permute.xlu0 %902
    %v905 = vmul.f32 %v887, %v903
    %s906 = scalar_lea.vmem [#allocation5], 48
    %v907 = vld [vmem:[%s906] sm:$0xff]
    %s908 = scalar_lea.vmem [#allocation8], 48
    %v909 = vld [vmem:[%s908] sm:$0xff]
    %911 = vrot.lane.b32.xlu0 %v867, 96
    %v912 = vpop.permute.xlu0 %911
    %v913 = vsel %vm111, %v912, 0
    %915 = vmatpush.msra.mxu0 0.0
    %916 = vmatpush.msra.mxu0 0.0
    %917 = vmatpush.msra.mxu0 0.0
    %918 = vmatpush.msra.mxu0 0.0
    %919 = vmatpush.msra.mxu0 0.0
    %920 = vmatpush.msra.mxu0 0.0
    %921 = vmatpush.msra.mxu0 0.0
    %922 = vmatpush.msra.mxu0 0.0
    %923 = vmatpush.msra.mxu0 0.0
    %924 = vmatpush.msra.mxu0 0.0
    %925 = vmatpush.msra.mxu0 0.0
    %926 = vmatpush.msra.mxu0 0.0
    %927 = vmatpush.msra.mxu0 %v98
    %928 = vmatpush.msra.mxu0 %v97
    %929 = vmatpush.msra.mxu0 %v96
    %930 = vmatpush.msra.mxu0 %v95
    %931 = vmatmul.f32.gmra.mxu0 %v913
    %v932 = vpop.f32.mrf.mxu0
    %v933 = vadd.f32 0.0, %v932
    %934 = vdwg.mxu0
    %936 = vrot.lane.b32.xlu0 %v905, 64
    %v937 = vpop.permute.xlu0 %936
    %v938 = vsel %vm111, %v937, 0
    %940 = vmatpush.msra.mxu0 0.0
    %941 = vmatpush.msra.mxu0 0.0
    %942 = vmatpush.msra.mxu0 0.0
    %943 = vmatpush.msra.mxu0 0.0
    %944 = vmatpush.msra.mxu0 0.0
    %945 = vmatpush.msra.mxu0 0.0
    %946 = vmatpush.msra.mxu0 0.0
    %947 = vmatpush.msra.mxu0 0.0
    %948 = vmatpush.msra.mxu0 0.0
    %949 = vmatpush.msra.mxu0 0.0
    %950 = vmatpush.msra.mxu0 0.0
    %951 = vmatpush.msra.mxu0 0.0
    %952 = vmatpush.msra.mxu0 %v102
    %953 = vmatpush.msra.mxu0 %v101
    %954 = vmatpush.msra.mxu0 %v100
    %955 = vmatpush.msra.mxu0 %v99
    %956 = vmatmul.f32.gmra.mxu0 %v938
    %v957 = vpop.f32.mrf.mxu0
    %v958 = vadd.f32 0.0, %v957
    %959 = vdwg.mxu0
    %v960 = vadd.f32 %v907, %v933
    %v961 = vxor.u32 %v960, 2147483648
    %v962 = vmul.f32 %v961, 1.442695
    %v963 = vpow.pop %v962
    %v964 = vadd.f32 %v963, 1.0
    %v965 = vrcp.pop %v964
    %v966 = vmul.f32 %v964, %v965
    %v967 = vsub.f32 1.0, %v966
    %v968 = vmul.f32 %v965, %v967
    %v969 = vadd.f32 %v965, %v968
    %vm970 = vweird.f32 %v964
    %vm971 = vweird.f32 %v965
    %vm972 = vmor %vm970, %vm971
    %v973 = vsel %vm972, %v965, %v969
    %v974 = vand.u32 2147483647, %v964
    %vm975 = vcmp.eq.f32.partialorder %v974, 8.507059e+37
    %v976 = vand.u32 %v964, 2147483648
    %v977 = vor.u32 1.1754944e-38, %v976
    %v978 = vsel %vm975, %v977, %v973
    %v979 = vmul.f32 1.0, %v978
    %v980 = vadd.f32 %v933, %v179
    %982 = vrot.lane.b32.xlu0 %v980, 64
    %v983 = vpop.permute.xlu0 %982
    %v985 = vmul.f32 %v979, %v983
    %987 = vrot.lane.b32.xlu0 %v985, 64
    %v988 = vpop.permute.xlu0 %987
    %v990 = vadd.f32 %v907, %v988
    %v991 = vtanh.pop %v990
    %v992 = vsub.f32 1.0, %v979
    %994 = vrot.lane.b32.xlu0 %v991, 96
    %v995 = vpop.permute.xlu0 %994
    %v997 = vmul.f32 %v992, %v995
    %v998 = vmul.f32 %v979, %v867
    %v999 = vadd.f32 %v997, %v998
    %v1000 = vadd.f32 %v909, %v958
    %v1001 = vxor.u32 %v1000, 2147483648
    %v1002 = vmul.f32 %v1001, 1.442695
    %v1003 = vpow.pop %v1002
    %v1004 = vadd.f32 %v1003, 1.0
    %v1005 = vrcp.pop %v1004
    %v1006 = vmul.f32 %v1004, %v1005
    %v1007 = vsub.f32 1.0, %v1006
    %v1008 = vmul.f32 %v1005, %v1007
    %v1009 = vadd.f32 %v1005, %v1008
    %vm1010 = vweird.f32 %v1004
    %vm1011 = vweird.f32 %v1005
    %vm1012 = vmor %vm1010, %vm1011
    %v1013 = vsel %vm1012, %v1005, %v1009
    %v1014 = vand.u32 2147483647, %v1004
    %vm1015 = vcmp.eq.f32.partialorder %v1014, 8.507059e+37
    %v1016 = vand.u32 %v1004, 2147483648
    %v1017 = vor.u32 1.1754944e-38, %v1016
    %v1018 = vsel %vm1015, %v1017, %v1013
    %v1019 = vmul.f32 1.0, %v1018
    %v1020 = vtanh.pop %v1000
    %v1021 = vmul.f32 %v1019, %v899
    %1023 = vrot.lane.b32.xlu0 %v1020, 32
    %v1024 = vpop.permute.xlu0 %1023
    %v1026 = vmul.f32 %v1019, %v1024
    %1028 = vrot.lane.b32.xlu0 %v1026, 32
    %v1029 = vpop.permute.xlu0 %1028
    %v1031 = vadd.f32 %v1021, %v1029
    %v1032 = vtanh.pop %v1031
    %1034 = vrot.lane.b32.xlu0 %v1032, 32
    %v1035 = vpop.permute.xlu0 %1034
    %v1037 = vmul.f32 %v1019, %v1035
    %s1038 = scalar_lea.vmem [#allocation5], 56
    %v1039 = vld [vmem:[%s1038] sm:$0xff]
    %s1040 = scalar_lea.vmem [#allocation8], 56
    %v1041 = vld [vmem:[%s1040] sm:$0xff]
    %1043 = vrot.lane.b32.xlu0 %v999, 96
    %v1044 = vpop.permute.xlu0 %1043
    %v1045 = vsel %vm111, %v1044, 0
    %1047 = vmatpush.msra.mxu0 0.0
    %1048 = vmatpush.msra.mxu0 0.0
    %1049 = vmatpush.msra.mxu0 0.0
    %1050 = vmatpush.msra.mxu0 0.0
    %1051 = vmatpush.msra.mxu0 0.0
    %1052 = vmatpush.msra.mxu0 0.0
    %1053 = vmatpush.msra.mxu0 0.0
    %1054 = vmatpush.msra.mxu0 0.0
    %1055 = vmatpush.msra.mxu0 0.0
    %1056 = vmatpush.msra.mxu0 0.0
    %1057 = vmatpush.msra.mxu0 0.0
    %1058 = vmatpush.msra.mxu0 0.0
    %1059 = vmatpush.msra.mxu0 %v98
    %1060 = vmatpush.msra.mxu0 %v97
    %1061 = vmatpush.msra.mxu0 %v96
    %1062 = vmatpush.msra.mxu0 %v95
    %1063 = vmatmul.f32.gmra.mxu0 %v1045
    %v1064 = vpop.f32.mrf.mxu0
    %v1065 = vadd.f32 0.0, %v1064
    %1066 = vdwg.mxu0
    %1068 = vrot.lane.b32.xlu0 %v1037, 64
    %v1069 = vpop.permute.xlu0 %1068
    %v1070 = vsel %vm111, %v1069, 0
    %1072 = vmatpush.msra.mxu0 0.0
    %1073 = vmatpush.msra.mxu0 0.0
    %1074 = vmatpush.msra.mxu0 0.0
    %1075 = vmatpush.msra.mxu0 0.0
    %1076 = vmatpush.msra.mxu0 0.0
    %1077 = vmatpush.msra.mxu0 0.0
    %1078 = vmatpush.msra.mxu0 0.0
    %1079 = vmatpush.msra.mxu0 0.0
    %1080 = vmatpush.msra.mxu0 0.0
    %1081 = vmatpush.msra.mxu0 0.0
    %1082 = vmatpush.msra.mxu0 0.0
    %1083 = vmatpush.msra.mxu0 0.0
    %1084 = vmatpush.msra.mxu0 %v102
    %1085 = vmatpush.msra.mxu0 %v101
    %1086 = vmatpush.msra.mxu0 %v100
    %1087 = vmatpush.msra.mxu0 %v99
    %1088 = vmatmul.f32.gmra.mxu0 %v1070
    %v1089 = vpop.f32.mrf.mxu0
    %v1090 = vadd.f32 0.0, %v1089
    %1091 = vdwg.mxu0
    %v1092 = vadd.f32 %v1039, %v1065
    %v1093 = vxor.u32 %v1092, 2147483648
    %v1094 = vmul.f32 %v1093, 1.442695
    %v1095 = vpow.pop %v1094
    %v1096 = vadd.f32 %v1095, 1.0
    %v1097 = vrcp.pop %v1096
    %v1098 = vmul.f32 %v1096, %v1097
    %v1099 = vsub.f32 1.0, %v1098
    %v1100 = vmul.f32 %v1097, %v1099
    %v1101 = vadd.f32 %v1097, %v1100
    %vm1102 = vweird.f32 %v1096
    %vm1103 = vweird.f32 %v1097
    %vm1104 = vmor %vm1102, %vm1103
    %v1105 = vsel %vm1104, %v1097, %v1101
    %v1106 = vand.u32 2147483647, %v1096
    %vm1107 = vcmp.eq.f32.partialorder %v1106, 8.507059e+37
    %v1108 = vand.u32 %v1096, 2147483648
    %v1109 = vor.u32 1.1754944e-38, %v1108
    %v1110 = vsel %vm1107, %v1109, %v1105
    %v1111 = vmul.f32 1.0, %v1110
    %v1112 = vadd.f32 %v1065, %v179
    %1114 = vrot.lane.b32.xlu0 %v1112, 64
    %v1115 = vpop.permute.xlu0 %1114
    %v1117 = vmul.f32 %v1111, %v1115
    %1119 = vrot.lane.b32.xlu0 %v1117, 64
    %v1120 = vpop.permute.xlu0 %1119
    %v1122 = vadd.f32 %v1039, %v1120
    %v1123 = vtanh.pop %v1122
    %v1124 = vsub.f32 1.0, %v1111
    %1126 = vrot.lane.b32.xlu0 %v1123, 96
    %v1127 = vpop.permute.xlu0 %1126
    %v1129 = vmul.f32 %v1124, %v1127
    %v1130 = vmul.f32 %v1111, %v999
    %v1131 = vadd.f32 %v1129, %v1130
    %v1132 = vadd.f32 %v1041, %v1090
    %v1133 = vxor.u32 %v1132, 2147483648
    %v1134 = vmul.f32 %v1133, 1.442695
    %v1135 = vpow.pop %v1134
    %v1136 = vadd.f32 %v1135, 1.0
    %v1137 = vrcp.pop %v1136
    %v1138 = vmul.f32 %v1136, %v1137
    %v1139 = vsub.f32 1.0, %v1138
    %v1140 = vmul.f32 %v1137, %v1139
    %v1141 = vadd.f32 %v1137, %v1140
    %vm1142 = vweird.f32 %v1136
    %vm1143 = vweird.f32 %v1137
    %vm1144 = vmor %vm1142, %vm1143
    %v1145 = vsel %vm1144, %v1137, %v1141
    %v1146 = vand.u32 2147483647, %v1136
    %vm1147 = vcmp.eq.f32.partialorder %v1146, 8.507059e+37
    %v1148 = vand.u32 %v1136, 2147483648
    %v1149 = vor.u32 1.1754944e-38, %v1148
    %v1150 = vsel %vm1147, %v1149, %v1145
    %v1151 = vmul.f32 1.0, %v1150
    %v1152 = vtanh.pop %v1132
    %v1153 = vmul.f32 %v1151, %v1031
    %1155 = vrot.lane.b32.xlu0 %v1152, 32
    %v1156 = vpop.permute.xlu0 %1155
    %v1158 = vmul.f32 %v1151, %v1156
    %1160 = vrot.lane.b32.xlu0 %v1158, 32
    %v1161 = vpop.permute.xlu0 %1160
    %v1163 = vadd.f32 %v1153, %v1161
    %v1164 = vtanh.pop %v1163
    %1166 = vrot.lane.b32.xlu0 %v1164, 32
    %v1167 = vpop.permute.xlu0 %1166
    %v1169 = vmul.f32 %v1151, %v1167
    %1171 = vrot.lane.b32.xlu0 %v1131, 96
    %v1172 = vpop.permute.xlu0 %1171
    %1174 = vst.msk [vmem:[#allocation2] sm:$0xff] %vm111, %v1172
    %1176 = vrot.lane.b32.xlu0 %v1169, 64
    %v1177 = vpop.permute.xlu0 %1176
    %1179 = vst.msk [vmem:[#allocation3] sm:$0xff] %vm111, %v1177
    %1181 = vrot.lane.b32.xlu0 %v1163, 96
    %v1182 = vpop.permute.xlu0 %1181
    %1184 = vst.msk [vmem:[#allocation4] sm:$0xff] %vm111, %v1182
    %1186 = vrot.lane.b32.xlu0 %v471, 32
    %v1187 = vpop.permute.xlu0 %1186
    %1189 = vrot.lane.b32.xlu0 %v603, 64
    %v1190 = vpop.permute.xlu0 %1189
    %1193 = vrot.lane.b32.xlu0 %v999, 32
    %v1194 = vpop.permute.xlu0 %1193
    %1196 = vrot.lane.b32.xlu0 %v1131, 64
    %v1197 = vpop.permute.xlu0 %1196
    %v1199 = vsel %vm111, %v252, %v339
    %vm1200 = vcmask 523264
    %v1201 = vsel %vm1200, %v1199, %v1187
    %vm1202 = vcmask 785408
    %v1203 = vsel %vm1202, %v1201, %v1190
    %v1204 = vsel %vm111, %v780, %v867
    %v1205 = vsel %vm1200, %v1204, %v1194
    %v1206 = vsel %vm1202, %v1205, %v1197
    %1207 = vst [vmem:[#allocation13] sm:$0xff] %v1203
    %1208 = vst [vmem:[#allocation13 + $0x8] sm:$0xff] %v1206
    %1210 = vrot.lane.b32.xlu0 %v377, 96
    %v1211 = vpop.permute.xlu0 %1210
    %1213 = vrot.lane.b32.xlu0 %v641, 32
    %v1214 = vpop.permute.xlu0 %1213
    %1217 = vrot.lane.b32.xlu0 %v905, 96
    %v1218 = vpop.permute.xlu0 %1217
    %1220 = vrot.lane.b32.xlu0 %v1169, 32
    %v1221 = vpop.permute.xlu0 %1220
    %v1223 = vsel %vm111, %v277, %v1211
    %v1224 = vsel %vm1200, %v1223, %v509
    %v1225 = vsel %vm1202, %v1224, %v1214
    %v1226 = vsel %vm111, %v805, %v1218
    %v1227 = vsel %vm1200, %v1226, %v1037
    %v1228 = vsel %vm1202, %v1227, %v1221
    %1229 = vst [vmem:[#allocation14] sm:$0xff] %v1225
    %1230 = vst [vmem:[#allocation14 + $0x8] sm:$0xff] %v1228
    // Predicated region
    $region42: #{tpu_custom_call.1} parent=1 // pred_check
      _
    $region43: #{tpu_custom_call.1} parent=1 // pred_check_branch
      %1232 = sbr.rel (0) target = $region45
    $region44: #{tpu_custom_call.1} parent=1 // pred_region
      %1234 = vsyncadd [#allocation7], 0
      %s1236 = sshll.u32 [#allocation13], 4
      %s1237 = int_to_ptr.vmem [resolvable:$true] %s1236
      %s1238 = sshll.u32 %s5, 4
      %s1239 = int_to_ptr.hbm [resolvable:$true] %s1238
      %1241 = dma.vmem_to_hbm [thread:$0]  %s1237, 256, %s1239, [#allocation7]
    $region45: #{tpu_custom_call.1} parent=1 // pred_fallthru
      _
    // Predicated region
    $region46: #{tpu_custom_call.1} parent=1 // pred_check
      _
    $region47: #{tpu_custom_call.1} parent=1 // pred_check_branch
      %1243 = sbr.rel (0) target = $region49
    $region48: #{tpu_custom_call.1} parent=1 // pred_region
      %1245 = vsyncadd [#allocation15], 0
      %s1247 = sshll.u32 [#allocation14], 4
      %s1248 = int_to_ptr.vmem [resolvable:$true] %s1247
      %s1249 = sshll.u32 %s6, 4
      %s1250 = int_to_ptr.hbm [resolvable:$true] %s1249
      %1252 = dma.vmem_to_hbm [thread:$0]  %s1248, 256, %s1250, [#allocation15]
    $region49: #{tpu_custom_call.1} parent=1 // pred_fallthru
      _
    // Predicated region
    $region50: #{tpu_custom_call.1} parent=1 // pred_check
      _
    $region51: #{tpu_custom_call.1} parent=1 // pred_check_branch
      %1254 = sbr.rel (0) target = $region53
    $region52: #{tpu_custom_call.1} parent=1 // pred_region
      %1256 = dma.done [#allocation7], 256
    $region53: #{tpu_custom_call.1} parent=1 // pred_fallthru
      _
    // Predicated region
    $region54: #{tpu_custom_call.1} parent=1 // pred_check
      _
    $region55: #{tpu_custom_call.1} parent=1 // pred_check_branch
      %1258 = sbr.rel (0) target = $region57
    $region56: #{tpu_custom_call.1} parent=1 // pred_region
      %1260 = dma.done [#allocation15], 256
    $region57: #{tpu_custom_call.1} parent=1 // pred_fallthru
      _
    %1261 = vsyncpa [#allocation6], 1
    %1262 = vsyncpa [#allocation9], 1
    %1263 = vsyncpa [#allocation12], 1
    %1264 = vsyncpa [#allocation7], 1
    %1265 = vsyncpa [#allocation15], 1

</llo_original>
